<compile_context>
chip_gen: v7x
topology: tpu7x:2x2x1
jax: 0.10.0
libtpu: 0.0.40
codegen_flags: <defaults>
</compile_context>

<pallas_src>
import functools

import numpy as np
import jax
import jax.numpy as jnp
from jax.experimental import pallas as pl
from jax.experimental.pallas import tpu as pltpu


# Fixed LeNet geometry (the classifier hard-codes 16*5*5 => 3x32x32 inputs).
IN_C, IN_H, IN_W = 3, 32, 32
C1, C2 = 6, 16            # conv1 / conv2 output channels
K = 5                     # conv kernel size
P1_W, P2_W = 14, 5        # pooled spatial widths after stage 1 / stage 2
FC1, FC2 = 120, 84
LANES = 128
TAPS_LANES = K * LANES    # 640: 5 row-taps folded into the contraction dim
ROW_PAD = 64              # zero rows appended below the last batch item


# ----------------------------------------------------------------------------
# One-time parameter preparation (outside the hot path)
# ----------------------------------------------------------------------------
def init_lenet_params(key, num_classes):
    ks = jax.random.split(key, 10)
    scale = 0.05
    return {
        "conv1_w": jax.random.normal(ks[0], (C1, IN_C, K, K), jnp.float32) * scale,
        "conv1_b": jax.random.normal(ks[1], (C1,), jnp.float32) * scale,
        "conv2_w": jax.random.normal(ks[2], (C2, C1, K, K), jnp.float32) * scale,
        "conv2_b": jax.random.normal(ks[3], (C2,), jnp.float32) * scale,
        "fc1_w": jax.random.normal(ks[4], (FC1, C2 * 5 * 5), jnp.float32) * scale,
        "fc1_b": jax.random.normal(ks[5], (FC1,), jnp.float32) * scale,
        "fc2_w": jax.random.normal(ks[6], (FC2, FC1), jnp.float32) * scale,
        "fc2_b": jax.random.normal(ks[7], (FC2,), jnp.float32) * scale,
        "fc3_w": jax.random.normal(ks[8], (num_classes, FC2), jnp.float32) * scale,
        "fc3_b": jax.random.normal(ks[9], (num_classes,), jnp.float32) * scale,
    }


def prepare_params(params, num_classes):
    """Build the tap-folded / parity-merged / padded bf16 weights once.

    w1 / w2 : [640, 256]  conv stage GEMMs (tap t in input lanes t*128..,
                          even output columns in lanes 0..127, odd in 128..255)
    w3      : [640, 128]  fc1 with the NCHW flatten + 5 row-taps folded in
    w4 / w5 : [128, 128]  fc2 / fc3 (pre-transposed, zero-padded)
    b       : [5, 128]    per-stage biases (f32)
    """
    cw1 = np.asarray(params["conv1_w"], np.float32)   # [6, 3, 5, 5]
    cb1 = np.asarray(params["conv1_b"], np.float32)
    cw2 = np.asarray(params["conv2_w"], np.float32)   # [16, 6, 5, 5]
    cb2 = np.asarray(params["conv2_b"], np.float32)
    fw1 = np.asarray(params["fc1_w"], np.float32)     # [120, 400]
    fb1 = np.asarray(params["fc1_b"], np.float32)
    fw2 = np.asarray(params["fc2_w"], np.float32)     # [84, 120]
    fb2 = np.asarray(params["fc2_b"], np.float32)
    fw3 = np.asarray(params["fc3_w"], np.float32)     # [ncls, 84]
    fb3 = np.asarray(params["fc3_b"], np.float32)

    b_all = np.zeros((5, LANES), np.float32)

    # conv1: input lanes (per tap t) = w*3 + c ; output lanes = parity*128 + pw*6 + oc
    w1 = np.zeros((TAPS_LANES, 2 * LANES), np.float32)
    for parity in range(2):
        for t in range(K):
            for pw in range(P1_W):
                for j in range(K):
                    win = 2 * pw + parity + j          # input image column
                    w1[t * LANES + win * IN_C: t * LANES + (win + 1) * IN_C,
                       parity * LANES + pw * C1: parity * LANES + (pw + 1) * C1] = \
                        cw1[:, :, t, j].T              # [c, oc]
    for pw in range(P1_W):
        b_all[0, pw * C1:(pw + 1) * C1] = cb1

    # conv2: input lanes (per tap t) = pw*6 + c ; output lanes = parity*128 + pw2*16 + oc2
    w2 = np.zeros((TAPS_LANES, 2 * LANES), np.float32)
    for parity in range(2):
        for t in range(K):
            for pw2 in range(P2_W):
                for j in range(K):
                    win = 2 * pw2 + parity + j         # pooled-width column of stage-1
                    w2[t * LANES + win * C1: t * LANES + (win + 1) * C1,
                       parity * LANES + pw2 * C2: parity * LANES + (pw2 + 1) * C2] = \
                        cw2[:, :, t, j].T              # [c, oc]
    for pw2 in range(P2_W):
        b_all[1, pw2 * C2:(pw2 + 1) * C2] = cb2

    # fc1 (+ NCHW flatten f = oc*25 + ph*5 + pw): 5 row-taps over ph, stride 4 rows
    w3 = np.zeros((TAPS_LANES, LANES), np.float32)
    for t in range(K):
        for pw2 in range(P2_W):
            for c2 in range(C2):
                w3[t * LANES + pw2 * C2 + c2, :FC1] = fw1[:, c2 * 25 + t * 5 + pw2]
    b_all[2, :FC1] = fb1

    # fc2 / fc3: pre-transposed, zero-padded to 128x128
    w4 = np.zeros((LANES, LANES), np.float32)
    w4[:FC1, :FC2] = fw2.T
    b_all[3, :FC2] = fb2
    w5 = np.zeros((LANES, LANES), np.float32)
    w5[:FC2, :num_classes] = fw3.T
    b_all[4, :num_classes] = fb3

    return {
        "w1": jnp.asarray(w1, jnp.bfloat16),
        "w2": jnp.asarray(w2, jnp.bfloat16),
        "w3": jnp.asarray(w3, jnp.bfloat16),
        "w4": jnp.asarray(w4, jnp.bfloat16),
        "w5": jnp.asarray(w5, jnp.bfloat16),
        "b": jnp.asarray(b_all, jnp.float32),
    }


# ----------------------------------------------------------------------------
# The fused Pallas kernel
# ----------------------------------------------------------------------------
def _lenet_kernel(a0_ref, w1_ref, w2_ref, w3_ref, w4_ref, w5_ref, b_ref, o_ref,
                  *, batch):
    f32, bf16 = jnp.float32, jnp.bfloat16
    R = batch * IN_H
    # Dot-operand row counts, padded to multiples of 16 (extra rows are
    # "don't-care" rows covered by ROW_PAD and never read downstream).
    n1, n1a, n2, n2a, n3 = R + 48, R + 40, R + 32, R + 16, R

    bias = b_ref[...]                                       # [5, 128] f32

    def taps(x, n, stride):
        """[n, 640] lhs: tap t of x (row-shift t*stride) in lanes t*128.."""
        return jnp.concatenate(
            [x[t * stride:t * stride + n, :] for t in range(K)], axis=1)

    def relu(v):
        return jnp.maximum(v, 0.0)

    # ---- stage 1: conv1 (3->6, 5x5) + ReLU + 2x2 max-pool, one MXU dot -----
    a0 = a0_ref[...]                                        # bf16 [rows0, 128]
    z = jnp.dot(taps(a0, n1, 1), w1_ref[...], preferred_element_type=f32)
    zw = jnp.maximum(z[:, :LANES], z[:, LANES:])            # pool over width
    zh = jnp.maximum(zw[:n1a, :], zw[1:1 + n1a, :])         # pool over height
    a1 = relu(zh + bias[0:1, :]).astype(bf16)               # bias/ReLU after pool (exact)
    # a1[b*32 + 2*ph, pw*6 + c] == pool1[b, c, ph, pw]

    # ---- stage 2: conv2 (6->16, 5x5) + ReLU + 2x2 max-pool, one MXU dot ----
    z = jnp.dot(taps(a1, n2, 2), w2_ref[...], preferred_element_type=f32)
    zw = jnp.maximum(z[:, :LANES], z[:, LANES:])
    zh = jnp.maximum(zw[:n2a, :], zw[2:2 + n2a, :])
    a2 = relu(zh + bias[1:2, :]).astype(bf16)
    # a2[b*32 + 4*ph2, pw2*16 + c2] == pool2[b, c2, ph2, pw2]

    # ---- stage 3: NCHW flatten + fc1 + ReLU (5 row-taps, stride 4, one dot) -
    a3 = relu(jnp.dot(taps(a2, n3, 4), w3_ref[...],
                      preferred_element_type=f32) + bias[2:3, :])

    # ---- fc2 + ReLU, fc3 ----------------------------------------------------
    a4 = relu(jnp.dot(a3.astype(bf16), w4_ref[...],
                      preferred_element_type=f32) + bias[3:4, :])
    a5 = jnp.dot(a4.astype(bf16), w5_ref[...],
                 preferred_element_type=f32) + bias[4:5, :]

    # ---- single bulk lane-dense store; item b's logits live at row b*32 -----
    o_ref[...] = a5


# ----------------------------------------------------------------------------
# Forward wrapper (one pallas_call; input relayout fusable into the call)
# ----------------------------------------------------------------------------
@functools.partial(jax.jit, static_argnames=("num_classes",))
def lenet_forward(weights, x, *, num_classes):
    batch = x.shape[0]
    R = batch * IN_H
    rows0 = R + ROW_PAD
    # Input relayout only: rows = (b, h), lanes = w*3 + c, bf16 (halves input
    # DMA), zero-padded to 128 lanes + ROW_PAD don't-care rows.  All other
    # layout work is pre-baked into the weights; all intermediate activations
    # stay inside the kernel.
    a0 = x.astype(jnp.bfloat16).transpose(0, 2, 3, 1).reshape(R, IN_W * IN_C)
    a0 = jnp.pad(a0, ((0, ROW_PAD), (0, LANES - IN_W * IN_C)))

    w1, w2, w3, w4, w5 = (weights["w1"], weights["w2"], weights["w3"],
                          weights["w4"], weights["w5"])
    b_all = weights["b"]

    n1, n2, n3 = R + 48, R + 32, R
    cost = pl.CostEstimate(
        flops=(2 * TAPS_LANES * 2 * LANES * (n1 + n2)
               + 2 * TAPS_LANES * LANES * n3
               + 2 * 2 * LANES * LANES * n3),
        transcendentals=0,
        bytes_accessed=(a0.size * 2
                        + (w1.size + w2.size + w3.size + w4.size + w5.size) * 2
                        + b_all.size * 4 + R * LANES * 4))

    out = pl.pallas_call(
        functools.partial(_lenet_kernel, batch=batch),
        out_shape=jax.ShapeDtypeStruct((R, LANES), jnp.float32),
        grid=(1,),
        in_specs=[
            pl.BlockSpec((rows0, LANES), lambda i: (0, 0)),
            pl.BlockSpec((TAPS_LANES, 2 * LANES), lambda i: (0, 0)),
            pl.BlockSpec((TAPS_LANES, 2 * LANES), lambda i: (0, 0)),
            pl.BlockSpec((TAPS_LANES, LANES), lambda i: (0, 0)),
            pl.BlockSpec((LANES, LANES), lambda i: (0, 0)),
            pl.BlockSpec((LANES, LANES), lambda i: (0, 0)),
            pl.BlockSpec((5, LANES), lambda i: (0, 0)),
        ],
        out_specs=pl.BlockSpec((R, LANES), lambda i: (0, 0)),
        compiler_params=pltpu.CompilerParams(
            dimension_semantics=("arbitrary",),
            vmem_limit_bytes=32 * 1024 * 1024,
            # Allow XLA to fuse the input relayout (transpose/reshape/pad/cast)
            # into the pallas_call instead of a separate launch + HBM trip.
            allow_input_fusion=[True, False, False, False, False, False, False]),
        cost_estimate=cost,
    )(a0, w1, w2, w3, w4, w5, b_all)

    # Batch item b's logits live at row b*32; lane padding sliced off here
    # (this wrapper slice exists anyway, so the ::IN_H pick costs nothing).
    return out[::IN_H, :num_classes]


# ----------------------------------------------------------------------------
# Pure-JAX f32 reference (matches the PyTorch module)
# ----------------------------------------------------------------------------
def lenet_reference(params, x):
    def conv_relu(h, w, b):
        y = jax.lax.conv_general_dilated(
            h, w, window_strides=(1, 1), padding="VALID",
            dimension_numbers=("NCHW", "OIHW", "NCHW"))
        return jax.nn.relu(y + b[None, :, None, None])

    def pool(h):
        return jax.lax.reduce_window(
            h, -jnp.inf, jax.lax.max, (1, 1, 2, 2), (1, 1, 2, 2), "VALID")

    h = pool(conv_relu(x, params["conv1_w"], params["conv1_b"]))
    h = pool(conv_relu(h, params["conv2_w"], params["conv2_b"]))
    h = h.reshape(h.shape[0], -1)                       # NCHW flatten
    h = jax.nn.relu(h @ params["fc1_w"].T + params["fc1_b"])
    h = jax.nn.relu(h @ params["fc2_w"].T + params["fc2_b"])
    return h @ params["fc3_w"].T + params["fc3_b"]


if __name__ == "__main__":
    num_classes = 10
    batch = 2
    key = jax.random.PRNGKey(0)
    k_param, k_input = jax.random.split(key)

    params = init_lenet_params(k_param, num_classes)
    # LeNet's classifier hard-codes 16*5*5, which implies 3x32x32 inputs.
    x = jax.random.normal(k_input, (batch, IN_C, IN_H, IN_W), jnp.float32)

    weights = prepare_params(params, num_classes)       # one-time weight prep
    out = lenet_forward(weights, x, num_classes=num_classes)
    out = jax.block_until_ready(out)

    assert out.shape == (batch, num_classes), out.shape
    assert out.dtype == jnp.float32
    assert bool(jnp.all(jnp.isfinite(out)))

    # Correctness vs. the f32 reference (kernel uses bf16 operands, f32 accum).
    ref = lenet_reference(params, x)
    err = float(jnp.max(jnp.abs(out - ref)))
    assert err < 2e-2, f"max abs error vs reference: {err}"
    print("KERNEL_OK")
</pallas_src>

<mosaic_0001>
module attributes {stable_mosaic.version = 11 : i64} {
  func.func @_lenet_kernel(%arg0: i32, %arg1: memref<128x128xbf16, #tpu.memory_space<vmem>>, %arg2: memref<640x256xbf16, #tpu.memory_space<vmem>>, %arg3: memref<640x256xbf16, #tpu.memory_space<vmem>>, %arg4: memref<640x128xbf16, #tpu.memory_space<vmem>>, %arg5: memref<128x128xbf16, #tpu.memory_space<vmem>>, %arg6: memref<128x128xbf16, #tpu.memory_space<vmem>>, %arg7: memref<5x128xf32, #tpu.memory_space<vmem>>, %arg8: memref<64x128xf32, #tpu.memory_space<vmem>>) attributes {dimension_semantics = [#tpu.dimension_semantics<arbitrary>], iteration_bounds = array<i64: 1>, scalar_prefetch = 0 : i64, scratch_operands = 0 : i64, tpu.core_type = #tpu.core_type<tc>, window_params = [{pipeline_mode = #tpu.pipeline_mode<synchronous>, transform_indices = @transform_0, window_bounds = array<i64: 128, 128>}, {pipeline_mode = #tpu.pipeline_mode<synchronous>, transform_indices = @transform_1, window_bounds = array<i64: 640, 256>}, {pipeline_mode = #tpu.pipeline_mode<synchronous>, transform_indices = @transform_2, window_bounds = array<i64: 640, 256>}, {pipeline_mode = #tpu.pipeline_mode<synchronous>, transform_indices = @transform_3, window_bounds = array<i64: 640, 128>}, {pipeline_mode = #tpu.pipeline_mode<synchronous>, transform_indices = @transform_4, window_bounds = array<i64: 128, 128>}, {pipeline_mode = #tpu.pipeline_mode<synchronous>, transform_indices = @transform_5, window_bounds = array<i64: 128, 128>}, {pipeline_mode = #tpu.pipeline_mode<synchronous>, transform_indices = @transform_6, window_bounds = array<i64: 5, 128>}, {pipeline_mode = #tpu.pipeline_mode<synchronous>, transform_indices = @transform_7, window_bounds = array<i64: 64, 128>}]} {
    %c0 = arith.constant 0 : index
    %c0_0 = arith.constant 0 : index
    %0 = vector.load %arg7[%c0, %c0_0] : memref<5x128xf32, #tpu.memory_space<vmem>>, vector<5x128xf32>
    %c0_1 = arith.constant 0 : index
    %c0_2 = arith.constant 0 : index
    %1 = vector.load %arg1[%c0_1, %c0_2] : memref<128x128xbf16, #tpu.memory_space<vmem>>, vector<128x128xbf16>
    %2 = vector.extract_strided_slice %1 {offsets = [0, 0], sizes = [112, 128], strides = [1, 1]} : vector<128x128xbf16> to vector<112x128xbf16>
    %3 = vector.extract_strided_slice %1 {offsets = [1, 0], sizes = [112, 128], strides = [1, 1]} : vector<128x128xbf16> to vector<112x128xbf16>
    %4 = vector.extract_strided_slice %1 {offsets = [2, 0], sizes = [112, 128], strides = [1, 1]} : vector<128x128xbf16> to vector<112x128xbf16>
    %5 = vector.extract_strided_slice %1 {offsets = [3, 0], sizes = [112, 128], strides = [1, 1]} : vector<128x128xbf16> to vector<112x128xbf16>
    %6 = vector.extract_strided_slice %1 {offsets = [4, 0], sizes = [112, 128], strides = [1, 1]} : vector<128x128xbf16> to vector<112x128xbf16>
    %7 = tpu.concatenate %2, %3, %4, %5, %6 in 1 : vector<112x128xbf16>, vector<112x128xbf16>, vector<112x128xbf16>, vector<112x128xbf16>, vector<112x128xbf16> -> vector<112x640xbf16>
    %c0_3 = arith.constant 0 : index
    %c0_4 = arith.constant 0 : index
    %8 = vector.load %arg2[%c0_3, %c0_4] : memref<640x256xbf16, #tpu.memory_space<vmem>>, vector<640x256xbf16>
    %cst = arith.constant dense<0.000000e+00> : vector<112x256xf32>
    %9 = tpu.matmul %7, %8, %cst {dimension_numbers = #tpu.dot_dimension_numbers<[1], [0], [0], [1], [0, 0, 1, 1], [], []>} : vector<112x640xbf16>, vector<640x256xbf16>, vector<112x256xf32> -> vector<112x256xf32>
    %10 = vector.extract_strided_slice %9 {offsets = [0, 0], sizes = [112, 128], strides = [1, 1]} : vector<112x256xf32> to vector<112x128xf32>
    %11 = vector.extract_strided_slice %9 {offsets = [0, 128], sizes = [112, 128], strides = [1, 1]} : vector<112x256xf32> to vector<112x128xf32>
    %12 = arith.maximumf %10, %11 : vector<112x128xf32>
    %13 = vector.extract_strided_slice %12 {offsets = [0, 0], sizes = [104, 128], strides = [1, 1]} : vector<112x128xf32> to vector<104x128xf32>
    %14 = vector.extract_strided_slice %12 {offsets = [1, 0], sizes = [104, 128], strides = [1, 1]} : vector<112x128xf32> to vector<104x128xf32>
    %15 = arith.maximumf %13, %14 : vector<104x128xf32>
    %16 = vector.extract_strided_slice %0 {offsets = [0, 0], sizes = [1, 128], strides = [1, 1]} : vector<5x128xf32> to vector<1x128xf32>
    %17 = vector.broadcast %16 : vector<1x128xf32> to vector<104x128xf32>
    %18 = arith.addf %15, %17 : vector<104x128xf32>
    %cst_5 = arith.constant 0.000000e+00 : f32
    %19 = vector.broadcast %cst_5 : f32 to vector<104x128xf32>
    %20 = arith.maximumf %18, %19 : vector<104x128xf32>
    %21 = arith.truncf %20 : vector<104x128xf32> to vector<104x128xbf16>
    %22 = vector.extract_strided_slice %21 {offsets = [0, 0], sizes = [96, 128], strides = [1, 1]} : vector<104x128xbf16> to vector<96x128xbf16>
    %23 = vector.extract_strided_slice %21 {offsets = [2, 0], sizes = [96, 128], strides = [1, 1]} : vector<104x128xbf16> to vector<96x128xbf16>
    %24 = vector.extract_strided_slice %21 {offsets = [4, 0], sizes = [96, 128], strides = [1, 1]} : vector<104x128xbf16> to vector<96x128xbf16>
    %25 = vector.extract_strided_slice %21 {offsets = [6, 0], sizes = [96, 128], strides = [1, 1]} : vector<104x128xbf16> to vector<96x128xbf16>
    %26 = vector.extract_strided_slice %21 {offsets = [8, 0], sizes = [96, 128], strides = [1, 1]} : vector<104x128xbf16> to vector<96x128xbf16>
    %27 = tpu.concatenate %22, %23, %24, %25, %26 in 1 : vector<96x128xbf16>, vector<96x128xbf16>, vector<96x128xbf16>, vector<96x128xbf16>, vector<96x128xbf16> -> vector<96x640xbf16>
    %c0_6 = arith.constant 0 : index
    %c0_7 = arith.constant 0 : index
    %28 = vector.load %arg3[%c0_6, %c0_7] : memref<640x256xbf16, #tpu.memory_space<vmem>>, vector<640x256xbf16>
    %cst_8 = arith.constant dense<0.000000e+00> : vector<96x256xf32>
    %29 = tpu.matmul %27, %28, %cst_8 {dimension_numbers = #tpu.dot_dimension_numbers<[1], [0], [0], [1], [0, 0, 1, 1], [], []>} : vector<96x640xbf16>, vector<640x256xbf16>, vector<96x256xf32> -> vector<96x256xf32>
    %30 = vector.extract_strided_slice %29 {offsets = [0, 0], sizes = [96, 128], strides = [1, 1]} : vector<96x256xf32> to vector<96x128xf32>
    %31 = vector.extract_strided_slice %29 {offsets = [0, 128], sizes = [96, 128], strides = [1, 1]} : vector<96x256xf32> to vector<96x128xf32>
    %32 = arith.maximumf %30, %31 : vector<96x128xf32>
    %33 = vector.extract_strided_slice %32 {offsets = [0, 0], sizes = [80, 128], strides = [1, 1]} : vector<96x128xf32> to vector<80x128xf32>
    %34 = vector.extract_strided_slice %32 {offsets = [2, 0], sizes = [80, 128], strides = [1, 1]} : vector<96x128xf32> to vector<80x128xf32>
    %35 = arith.maximumf %33, %34 : vector<80x128xf32>
    %36 = vector.extract_strided_slice %0 {offsets = [1, 0], sizes = [1, 128], strides = [1, 1]} : vector<5x128xf32> to vector<1x128xf32>
    %37 = vector.broadcast %36 : vector<1x128xf32> to vector<80x128xf32>
    %38 = arith.addf %35, %37 : vector<80x128xf32>
    %cst_9 = arith.constant 0.000000e+00 : f32
    %39 = vector.broadcast %cst_9 : f32 to vector<80x128xf32>
    %40 = arith.maximumf %38, %39 : vector<80x128xf32>
    %41 = arith.truncf %40 : vector<80x128xf32> to vector<80x128xbf16>
    %42 = vector.extract_strided_slice %41 {offsets = [0, 0], sizes = [64, 128], strides = [1, 1]} : vector<80x128xbf16> to vector<64x128xbf16>
    %43 = vector.extract_strided_slice %41 {offsets = [4, 0], sizes = [64, 128], strides = [1, 1]} : vector<80x128xbf16> to vector<64x128xbf16>
    %44 = vector.extract_strided_slice %41 {offsets = [8, 0], sizes = [64, 128], strides = [1, 1]} : vector<80x128xbf16> to vector<64x128xbf16>
    %45 = vector.extract_strided_slice %41 {offsets = [12, 0], sizes = [64, 128], strides = [1, 1]} : vector<80x128xbf16> to vector<64x128xbf16>
    %46 = vector.extract_strided_slice %41 {offsets = [16, 0], sizes = [64, 128], strides = [1, 1]} : vector<80x128xbf16> to vector<64x128xbf16>
    %47 = tpu.concatenate %42, %43, %44, %45, %46 in 1 : vector<64x128xbf16>, vector<64x128xbf16>, vector<64x128xbf16>, vector<64x128xbf16>, vector<64x128xbf16> -> vector<64x640xbf16>
    %c0_10 = arith.constant 0 : index
    %c0_11 = arith.constant 0 : index
    %48 = vector.load %arg4[%c0_10, %c0_11] : memref<640x128xbf16, #tpu.memory_space<vmem>>, vector<640x128xbf16>
    %cst_12 = arith.constant dense<0.000000e+00> : vector<64x128xf32>
    %49 = tpu.matmul %47, %48, %cst_12 {dimension_numbers = #tpu.dot_dimension_numbers<[1], [0], [0], [1], [0, 0, 1, 1], [], []>} : vector<64x640xbf16>, vector<640x128xbf16>, vector<64x128xf32> -> vector<64x128xf32>
    %50 = vector.extract_strided_slice %0 {offsets = [2, 0], sizes = [1, 128], strides = [1, 1]} : vector<5x128xf32> to vector<1x128xf32>
    %51 = vector.broadcast %50 : vector<1x128xf32> to vector<64x128xf32>
    %52 = arith.addf %49, %51 : vector<64x128xf32>
    %cst_13 = arith.constant 0.000000e+00 : f32
    %53 = vector.broadcast %cst_13 : f32 to vector<64x128xf32>
    %54 = arith.maximumf %52, %53 : vector<64x128xf32>
    %55 = arith.truncf %54 : vector<64x128xf32> to vector<64x128xbf16>
    %c0_14 = arith.constant 0 : index
    %c0_15 = arith.constant 0 : index
    %56 = vector.load %arg5[%c0_14, %c0_15] : memref<128x128xbf16, #tpu.memory_space<vmem>>, vector<128x128xbf16>
    %cst_16 = arith.constant dense<0.000000e+00> : vector<64x128xf32>
    %57 = tpu.matmul %55, %56, %cst_16 {dimension_numbers = #tpu.dot_dimension_numbers<[1], [0], [0], [1], [0, 0, 1, 1], [], []>} : vector<64x128xbf16>, vector<128x128xbf16>, vector<64x128xf32> -> vector<64x128xf32>
    %58 = vector.extract_strided_slice %0 {offsets = [3, 0], sizes = [1, 128], strides = [1, 1]} : vector<5x128xf32> to vector<1x128xf32>
    %59 = vector.broadcast %58 : vector<1x128xf32> to vector<64x128xf32>
    %60 = arith.addf %57, %59 : vector<64x128xf32>
    %cst_17 = arith.constant 0.000000e+00 : f32
    %61 = vector.broadcast %cst_17 : f32 to vector<64x128xf32>
    %62 = arith.maximumf %60, %61 : vector<64x128xf32>
    %63 = arith.truncf %62 : vector<64x128xf32> to vector<64x128xbf16>
    %c0_18 = arith.constant 0 : index
    %c0_19 = arith.constant 0 : index
    %64 = vector.load %arg6[%c0_18, %c0_19] : memref<128x128xbf16, #tpu.memory_space<vmem>>, vector<128x128xbf16>
    %cst_20 = arith.constant dense<0.000000e+00> : vector<64x128xf32>
    %65 = tpu.matmul %63, %64, %cst_20 {dimension_numbers = #tpu.dot_dimension_numbers<[1], [0], [0], [1], [0, 0, 1, 1], [], []>} : vector<64x128xbf16>, vector<128x128xbf16>, vector<64x128xf32> -> vector<64x128xf32>
    %66 = vector.extract_strided_slice %0 {offsets = [4, 0], sizes = [1, 128], strides = [1, 1]} : vector<5x128xf32> to vector<1x128xf32>
    %67 = vector.broadcast %66 : vector<1x128xf32> to vector<64x128xf32>
    %68 = arith.addf %65, %67 : vector<64x128xf32>
    %c0_21 = arith.constant 0 : index
    %c0_22 = arith.constant 0 : index
    %69 = vector.load %arg8[%c0_21, %c0_22] : memref<64x128xf32, #tpu.memory_space<vmem>>, vector<64x128xf32>
    tpu.vector_store %arg8[%c0_21, %c0_22], %68 {strides = array<i32>} : memref<64x128xf32, #tpu.memory_space<vmem>>, vector<64x128xf32>,
    return
  }
  func.func @transform_0(%arg0: i32) -> (i32, i32) {
    %c0_i32 = arith.constant 0 : i32
    %c0_i32_0 = arith.constant 0 : i32
    %c0_i32_1 = arith.constant 0 : i32
    return %c0_i32, %c0_i32_0 : i32, i32
  }
  func.func @transform_1(%arg0: i32) -> (i32, i32) {
    %c0_i32 = arith.constant 0 : i32
    %c0_i32_0 = arith.constant 0 : i32
    %c0_i32_1 = arith.constant 0 : i32
    return %c0_i32, %c0_i32_0 : i32, i32
  }
  func.func @transform_2(%arg0: i32) -> (i32, i32) {
    %c0_i32 = arith.constant 0 : i32
    %c0_i32_0 = arith.constant 0 : i32
    %c0_i32_1 = arith.constant 0 : i32
    return %c0_i32, %c0_i32_0 : i32, i32
  }
  func.func @transform_3(%arg0: i32) -> (i32, i32) {
    %c0_i32 = arith.constant 0 : i32
    %c0_i32_0 = arith.constant 0 : i32
    %c0_i32_1 = arith.constant 0 : i32
    return %c0_i32, %c0_i32_0 : i32, i32
  }
  func.func @transform_4(%arg0: i32) -> (i32, i32) {
    %c0_i32 = arith.constant 0 : i32
    %c0_i32_0 = arith.constant 0 : i32
    %c0_i32_1 = arith.constant 0 : i32
    return %c0_i32, %c0_i32_0 : i32, i32
  }
  func.func @transform_5(%arg0: i32) -> (i32, i32) {
    %c0_i32 = arith.constant 0 : i32
    %c0_i32_0 = arith.constant 0 : i32
    %c0_i32_1 = arith.constant 0 : i32
    return %c0_i32, %c0_i32_0 : i32, i32
  }
  func.func @transform_6(%arg0: i32) -> (i32, i32) {
    %c0_i32 = arith.constant 0 : i32
    %c0_i32_0 = arith.constant 0 : i32
    %c0_i32_1 = arith.constant 0 : i32
    return %c0_i32, %c0_i32_0 : i32, i32
  }
  func.func @transform_7(%arg0: i32) -> (i32, i32) {
    %c0_i32 = arith.constant 0 : i32
    %c0_i32_0 = arith.constant 0 : i32
    %c0_i32_1 = arith.constant 0 : i32
    return %c0_i32, %c0_i32_0 : i32, i32
  }
}

</mosaic_0001>

<llo_original>
// kernel: lenet_forward.2
$region0: #{lenet_forward.2}
  #allocation0 [shape = 'u32[]', space=smem, size = 0x4, offset = 0x4, fixed_abs, tag = 'smem constant byte address 0x4 - core index']
  #allocation1 [shape = 'u32[144,128]{1,0:T(1,128)}', space=vmem, size = 0x12000, scoped, tag = 'internal scratch']
  #allocation2 [shape = 'u32[2048]{0}', space=vmem, size = 0x2000, scoped, tag = 'scoped memory for lenet_forward.2']
  #allocation3 [shape = 'u32[2048]{0}', space=vmem, size = 0x2000, scoped, tag = 'scoped memory for lenet_forward.2']
  #allocation4 [shape = 'u32[2048]{0}', space=vmem, size = 0x2000, scoped, tag = 'scoped memory for lenet_forward.2']
  #allocation5 [shape = 'u32[2048]{0}', space=vmem, size = 0x2000, scoped, tag = 'scoped memory for lenet_forward.2']
  #allocation6 [shape = 'u32[2048]{0}', space=vmem, size = 0x2000, scoped, tag = 'scoped memory for lenet_forward.2']
  %s0 = inlined_call_operand.vmem [shape: bf16[640,256], index: 0, kind: input, shape index: {}]
  %s1 = inlined_call_operand.hbm [shape: bf16[640,256], index: 1, kind: input, shape index: {}]
  %s2 = inlined_call_operand.hbm [shape: bf16[640,128], index: 2, kind: input, shape index: {}]
  %s3 = inlined_call_operand.vmem [shape: bf16[128,128], index: 3, kind: input, shape index: {}]
  %s4 = inlined_call_operand.hbm [shape: bf16[128,128], index: 4, kind: input, shape index: {}]
  %s5 = inlined_call_operand.hbm [shape: f32[5,128], index: 5, kind: input, shape index: {}]
  %s6 = inlined_call_operand.vmem [shape: bf16[64,96], index: 6, kind: input, shape index: {}]
  %s7 = inlined_call_operand.<no memory space> [shape: bf16[], index: 7, kind: input, shape index: {}]
  %s8 = inlined_call_operand.vmem [shape: f32[64,128], index: 8, kind: output, shape index: {}]
  %s9 = sld [smem:[#allocation0]]
  $region54: #{lenet_forward.2} parent=0
    _
  %s11 = ssub.s32 1, %s9
  %s12 = scalar_select 0, %s11, %s9
  %v13 = vstv %s7
  %v14 = vunpack.i.l.bf16 %v13
  %v16 = vunpack.i.h.bf16 %v13
  $region1: #{lenet_forward.2} parent=0
    #allocation7 [shape = 'u8[327680]{0}', space=vmem, size = 0x50000, scoped, tag = 'input window, operand 2, single buffered']
    #allocation8 [shape = 's32[1]{0}', space=sflag, size = 0x4, scoped, tag = 'scoped memory for lenet_forward.2']
    #allocation9 [shape = 'u8[163840]{0}', space=vmem, size = 0x28000, scoped, tag = 'input window, operand 3, single buffered']
    #allocation10 [shape = 's32[1]{0}', space=sflag, size = 0x4, scoped, tag = 'scoped memory for lenet_forward.2']
    #allocation11 [shape = 'u8[32768]{0}', space=vmem, size = 0x8000, scoped, tag = 'input window, operand 5, single buffered']
    #allocation12 [shape = 'u8[4096]{0}', space=vmem, size = 0x1000, scoped, tag = 'input window, operand 6, single buffered']
    #allocation13 [shape = 's32[1]{0}', space=sflag, size = 0x4, scoped, tag = 'scoped memory for lenet_forward.2']
    #allocation14 [shape = 'u8[32768]{0}', space=vmem, size = 0x8000, dematerialized = true, scoped, tag = 'FusionAdapter Buffer %fusion.1 = bf16[128,128]{1,0:T(8,128)(2,1)} fusion(%param_6.1, %param_7), kind=kLoop, calls=%fused_computation.2.clone, metadata={op_name="jit(lenet_forward)/jit(_pad)/pad" stack_frame_id=8}']
    %18 = vsyncpa [#allocation8], 0
    %19 = vsyncpa [#allocation10], 0
    %20 = vsyncpa [#allocation13], 0
    // Predicated region
    $region2: #{lenet_forward.2} parent=1 // pred_check
      _
    $region3: #{lenet_forward.2} parent=1 // pred_check_branch
      %22 = sbr.rel (0) target = $region5
    $region4: #{lenet_forward.2} parent=1 // pred_region
      _
    $region5: #{lenet_forward.2} parent=1 // pred_fallthru
      _
    // Predicated region
    $region6: #{lenet_forward.2} parent=1 // pred_check
      _
    $region7: #{lenet_forward.2} parent=1 // pred_check_branch
      %24 = sbr.rel (0) target = $region9
    $region8: #{lenet_forward.2} parent=1 // pred_region
      _
    $region9: #{lenet_forward.2} parent=1 // pred_fallthru
      _
    // Predicated region
    $region10: #{lenet_forward.2} parent=1 // pred_check
      _
    $region11: #{lenet_forward.2} parent=1 // pred_check_branch
      %26 = sbr.rel (0) target = $region13
    $region12: #{lenet_forward.2} parent=1 // pred_region
      %s28 = ssub.s32 10240, 10240
      %29 = vsyncadd [#allocation8], %s28
      %s30 = sshll.u32 [#allocation7], 4
      %s31 = int_to_ptr.vmem [resolvable:$true] %s30
      %36 = dma.hbm_to_vmem [thread:$0]  %s1, 10240, %s31, [#allocation8], 128, 128, 8
    $region13: #{lenet_forward.2} parent=1 // pred_fallthru
      _
    // Predicated region
    $region14: #{lenet_forward.2} parent=1 // pred_check
      _
    $region15: #{lenet_forward.2} parent=1 // pred_check_branch
      %38 = sbr.rel (0) target = $region17
    $region16: #{lenet_forward.2} parent=1 // pred_region
      %s40 = ssub.s32 5120, 5120
      %41 = vsyncadd [#allocation10], %s40
      %s42 = sshll.u32 [#allocation9], 4
      %s43 = int_to_ptr.vmem [resolvable:$true] %s42
      %48 = dma.hbm_to_vmem [thread:$0]  %s2, 5120, %s43, [#allocation10], 64, 64, 4
    $region17: #{lenet_forward.2} parent=1 // pred_fallthru
      _
    // Predicated region
    $region18: #{lenet_forward.2} parent=1 // pred_check
      _
    $region19: #{lenet_forward.2} parent=1 // pred_check_branch
      %50 = sbr.rel (0) target = $region21
    $region20: #{lenet_forward.2} parent=1 // pred_region
      _
    $region21: #{lenet_forward.2} parent=1 // pred_fallthru
      _
    // Predicated region
    $region22: #{lenet_forward.2} parent=1 // pred_check
      _
    $region23: #{lenet_forward.2} parent=1 // pred_check_branch
      %52 = sbr.rel (0) target = $region25
    $region24: #{lenet_forward.2} parent=1 // pred_region
      %s54 = ssub.s32 1024, 1024
      %55 = vsyncadd [#allocation10], %s54
      %s56 = sshll.u32 [#allocation11], 4
      %s57 = int_to_ptr.vmem [resolvable:$true] %s56
      %62 = dma.hbm_to_vmem [thread:$0]  %s4, 1024, %s57, [#allocation10], 64, 64, 4
    $region25: #{lenet_forward.2} parent=1 // pred_fallthru
      _
    // Predicated region
    $region26: #{lenet_forward.2} parent=1 // pred_check
      _
    $region27: #{lenet_forward.2} parent=1 // pred_check_branch
      %64 = sbr.rel (0) target = $region29
    $region28: #{lenet_forward.2} parent=1 // pred_region
      %s66 = ssub.s32 128, 128
      %67 = vsyncadd [#allocation13], %s66
      %s69 = sshll.u32 [#allocation12], 4
      %s70 = int_to_ptr.vmem [resolvable:$true] %s69
      %72 = dma.hbm_to_vmem [thread:$0]  %s5, 128, %s70, [#allocation13]
    $region29: #{lenet_forward.2} parent=1 // pred_fallthru
      _
    // Predicated region
    $region30: #{lenet_forward.2} parent=1 // pred_check
      _
    $region31: #{lenet_forward.2} parent=1 // pred_check_branch
      %74 = sbr.rel (0) target = $region33
    $region32: #{lenet_forward.2} parent=1 // pred_region
      %75 = dma.done [#allocation8], 10240
    $region33: #{lenet_forward.2} parent=1 // pred_fallthru
      _
    // Predicated region
    $region34: #{lenet_forward.2} parent=1 // pred_check
      _
    $region35: #{lenet_forward.2} parent=1 // pred_check_branch
      %77 = sbr.rel (0) target = $region37
    $region36: #{lenet_forward.2} parent=1 // pred_region
      %78 = dma.done [#allocation10], 5120
    $region37: #{lenet_forward.2} parent=1 // pred_fallthru
      _
    // Predicated region
    $region38: #{lenet_forward.2} parent=1 // pred_check
      _
    $region39: #{lenet_forward.2} parent=1 // pred_check_branch
      %80 = sbr.rel (0) target = $region41
    $region40: #{lenet_forward.2} parent=1 // pred_region
      %81 = dma.done [#allocation10], 1024
    $region41: #{lenet_forward.2} parent=1 // pred_fallthru
      _
    // Predicated region
    $region42: #{lenet_forward.2} parent=1 // pred_check
      _
    $region43: #{lenet_forward.2} parent=1 // pred_check_branch
      %83 = sbr.rel (0) target = $region45
    $region44: #{lenet_forward.2} parent=1 // pred_region
      %84 = dma.done [#allocation13], 128
    $region45: #{lenet_forward.2} parent=1 // pred_fallthru
      _
    %s86 = sor.u32 255, 127
    %s87 = sand.u32 %s86, 85
    %s88 = sshrl.u32 %s87, 1
    %s89 = sor.u32 %s87, %s88
    %s90 = sand.u32 51, %s89
    %s91 = sshrl.u32 %s90, 2
    %s92 = sor.u32 %s90, %s91
    %s93 = sand.u32 15, %s92
    %v94 = vld [vmem:[%s6] sm:%s93]
    %v95 = vunpack.c.l.bf16 %v94
    %v96 = vunpack.c.h.bf16 %v94
    %v97 = vlaneseq
    %v98 = vand.u32 %v97, 127
    %vm100 = vcmp.lt.s32.totalorder %v98, 96
    %v101 = vsel %vm100, %v95, %v14
    %v102 = vpack.c.bf16 0.0, %v101
    %104 = vst [vmem:[#allocation14] sm:$0xf] %v102
    %s105 = scalar_lea.vmem %s6, 4
    %s107 = sor.u32 255, 127
    %s108 = sand.u32 %s107, 85
    %s109 = sshrl.u32 %s108, 1
    %s110 = sor.u32 %s108, %s109
    %s111 = sand.u32 51, %s110
    %s112 = sshrl.u32 %s111, 2
    %s113 = sor.u32 %s111, %s112
    %s114 = sand.u32 15, %s113
    %v115 = vld [vmem:[%s105] sm:%s114]
    %v116 = vunpack.c.l.bf16 %v115
    %v117 = vunpack.c.h.bf16 %v115
    %v118 = vlaneseq
    %v119 = vand.u32 %v118, 127
    %vm121 = vcmp.lt.s32.totalorder %v119, 96
    %v122 = vsel %vm121, %v116, %v14
    %s123 = scalar_lea.vmem [#allocation14], 4
    %v124 = vpack.c.bf16 0.0, %v122
    %126 = vst [vmem:[%s123] sm:$0xf] %v124
    %s127 = scalar_lea.vmem %s6, 8
    %s129 = sor.u32 255, 127
    %s130 = sand.u32 %s129, 85
    %s131 = sshrl.u32 %s130, 1
    %s132 = sor.u32 %s130, %s131
    %s133 = sand.u32 51, %s132
    %s134 = sshrl.u32 %s133, 2
    %s135 = sor.u32 %s133, %s134
    %s136 = sand.u32 15, %s135
    %v137 = vld [vmem:[%s127] sm:%s136]
    %v138 = vunpack.c.l.bf16 %v137
    %v139 = vunpack.c.h.bf16 %v137
    %v140 = vlaneseq
    %v141 = vand.u32 %v140, 127
    %vm143 = vcmp.lt.s32.totalorder %v141, 96
    %v144 = vsel %vm143, %v138, %v14
    %s145 = scalar_lea.vmem [#allocation14], 8
    %v146 = vpack.c.bf16 0.0, %v144
    %148 = vst [vmem:[%s145] sm:$0xf] %v146
    %s149 = scalar_lea.vmem %s6, 12
    %s151 = sor.u32 255, 127
    %s152 = sand.u32 %s151, 85
    %s153 = sshrl.u32 %s152, 1
    %s154 = sor.u32 %s152, %s153
    %s155 = sand.u32 51, %s154
    %s156 = sshrl.u32 %s155, 2
    %s157 = sor.u32 %s155, %s156
    %s158 = sand.u32 15, %s157
    %v159 = vld [vmem:[%s149] sm:%s158]
    %v160 = vunpack.c.l.bf16 %v159
    %v161 = vunpack.c.h.bf16 %v159
    %v162 = vlaneseq
    %v163 = vand.u32 %v162, 127
    %vm165 = vcmp.lt.s32.totalorder %v163, 96
    %v166 = vsel %vm165, %v160, %v14
    %s167 = scalar_lea.vmem [#allocation14], 12
    %v168 = vpack.c.bf16 0.0, %v166
    %170 = vst [vmem:[%s167] sm:$0xf] %v168
    %s171 = scalar_lea.vmem %s6, 16
    %s173 = sor.u32 255, 127
    %s174 = sand.u32 %s173, 85
    %s175 = sshrl.u32 %s174, 1
    %s176 = sor.u32 %s174, %s175
    %s177 = sand.u32 51, %s176
    %s178 = sshrl.u32 %s177, 2
    %s179 = sor.u32 %s177, %s178
    %s180 = sand.u32 15, %s179
    %v181 = vld [vmem:[%s171] sm:%s180]
    %v182 = vunpack.c.l.bf16 %v181
    %v183 = vunpack.c.h.bf16 %v181
    %v184 = vlaneseq
    %v185 = vand.u32 %v184, 127
    %vm187 = vcmp.lt.s32.totalorder %v185, 96
    %v188 = vsel %vm187, %v182, %v14
    %s189 = scalar_lea.vmem [#allocation14], 16
    %v190 = vpack.c.bf16 0.0, %v188
    %192 = vst [vmem:[%s189] sm:$0xf] %v190
    %s193 = scalar_lea.vmem %s6, 20
    %s195 = sor.u32 255, 127
    %s196 = sand.u32 %s195, 85
    %s197 = sshrl.u32 %s196, 1
    %s198 = sor.u32 %s196, %s197
    %s199 = sand.u32 51, %s198
    %s200 = sshrl.u32 %s199, 2
    %s201 = sor.u32 %s199, %s200
    %s202 = sand.u32 15, %s201
    %v203 = vld [vmem:[%s193] sm:%s202]
    %v204 = vunpack.c.l.bf16 %v203
    %v205 = vunpack.c.h.bf16 %v203
    %v206 = vlaneseq
    %v207 = vand.u32 %v206, 127
    %vm209 = vcmp.lt.s32.totalorder %v207, 96
    %v210 = vsel %vm209, %v204, %v14
    %s211 = scalar_lea.vmem [#allocation14], 20
    %v212 = vpack.c.bf16 0.0, %v210
    %214 = vst [vmem:[%s211] sm:$0xf] %v212
    %s215 = scalar_lea.vmem %s6, 24
    %s217 = sor.u32 255, 127
    %s218 = sand.u32 %s217, 85
    %s219 = sshrl.u32 %s218, 1
    %s220 = sor.u32 %s218, %s219
    %s221 = sand.u32 51, %s220
    %s222 = sshrl.u32 %s221, 2
    %s223 = sor.u32 %s221, %s222
    %s224 = sand.u32 15, %s223
    %v225 = vld [vmem:[%s215] sm:%s224]
    %v226 = vunpack.c.l.bf16 %v225
    %v227 = vunpack.c.h.bf16 %v225
    %v228 = vlaneseq
    %v229 = vand.u32 %v228, 127
    %vm231 = vcmp.lt.s32.totalorder %v229, 96
    %v232 = vsel %vm231, %v226, %v14
    %s233 = scalar_lea.vmem [#allocation14], 24
    %v234 = vpack.c.bf16 0.0, %v232
    %236 = vst [vmem:[%s233] sm:$0xf] %v234
    %s237 = scalar_lea.vmem %s6, 28
    %s239 = sor.u32 255, 127
    %s240 = sand.u32 %s239, 85
    %s241 = sshrl.u32 %s240, 1
    %s242 = sor.u32 %s240, %s241
    %s243 = sand.u32 51, %s242
    %s244 = sshrl.u32 %s243, 2
    %s245 = sor.u32 %s243, %s244
    %s246 = sand.u32 15, %s245
    %v247 = vld [vmem:[%s237] sm:%s246]
    %v248 = vunpack.c.l.bf16 %v247
    %v249 = vunpack.c.h.bf16 %v247
    %v250 = vlaneseq
    %v251 = vand.u32 %v250, 127
    %vm253 = vcmp.lt.s32.totalorder %v251, 96
    %v254 = vsel %vm253, %v248, %v14
    %s255 = scalar_lea.vmem [#allocation14], 28
    %v256 = vpack.c.bf16 0.0, %v254
    %258 = vst [vmem:[%s255] sm:$0xf] %v256
    %s259 = scalar_lea.vmem [#allocation14], 32
    %v260 = vpack.c.bf16 0.0, %v14
    %262 = vst [vmem:[%s259] sm:$0xf] %v260
    %s263 = scalar_lea.vmem [#allocation14], 36
    %v264 = vpack.c.bf16 0.0, %v14
    %266 = vst [vmem:[%s263] sm:$0xf] %v264
    %s267 = scalar_lea.vmem [#allocation14], 40
    %v268 = vpack.c.bf16 0.0, %v14
    %270 = vst [vmem:[%s267] sm:$0xf] %v268
    %s271 = scalar_lea.vmem [#allocation14], 44
    %v272 = vpack.c.bf16 0.0, %v14
    %274 = vst [vmem:[%s271] sm:$0xf] %v272
    %s275 = scalar_lea.vmem [#allocation14], 48
    %v276 = vpack.c.bf16 0.0, %v14
    %278 = vst [vmem:[%s275] sm:$0xf] %v276
    %s279 = scalar_lea.vmem [#allocation14], 52
    %v280 = vpack.c.bf16 0.0, %v14
    %282 = vst [vmem:[%s279] sm:$0xf] %v280
    %s283 = scalar_lea.vmem [#allocation14], 56
    %v284 = vpack.c.bf16 0.0, %v14
    %286 = vst [vmem:[%s283] sm:$0xf] %v284
    %s287 = scalar_lea.vmem [#allocation14], 60
    %v288 = vpack.c.bf16 0.0, %v14
    %290 = vst [vmem:[%s287] sm:$0xf] %v288
    %v292 = vld [vmem:[#allocation12] sm:$0x1f]
    %v293 = vld [vmem:[#allocation14] sm:$0xf]
    %v294 = vld [vmem:[#allocation14 + $0x4] sm:$0xf]
    %v295 = vld [vmem:[#allocation14 + $0x8] sm:$0xf]
    %v296 = vld [vmem:[#allocation14 + $0xc] sm:$0xf]
    %v297 = vld [vmem:[#allocation14 + $0x10] sm:$0xf]
    %v298 = vld [vmem:[#allocation14 + $0x14] sm:$0xf]
    %v299 = vld [vmem:[#allocation14 + $0x18] sm:$0xf]
    %v300 = vld [vmem:[#allocation14 + $0x1c] sm:$0xf]
    %v301 = vld [vmem:[#allocation14 + $0x20] sm:$0xf]
    %v302 = vld [vmem:[#allocation14 + $0x24] sm:$0xf]
    %v303 = vld [vmem:[#allocation14 + $0x28] sm:$0xf]
    %v304 = vld [vmem:[#allocation14 + $0x2c] sm:$0xf]
    %v305 = vld [vmem:[#allocation14 + $0x30] sm:$0xf]
    %v306 = vld [vmem:[#allocation14 + $0x34] sm:$0xf]
    %v307 = vld [vmem:[#allocation14 + $0x38] sm:$0xf]
    %v322 = vunpack.c.l.b16 %v293
    %v323 = vunpack.c.l.b16 %v294
    %v324 = vunpack.c.l.b16 %v295
    %v325 = vunpack.c.l.b16 %v296
    %v326 = vunpack.c.l.b16 %v297
    %v327 = vunpack.c.l.b16 %v298
    %v328 = vunpack.c.l.b16 %v299
    %v329 = vunpack.c.l.b16 %v300
    %v330 = vunpack.c.l.b16 %v301
    %v331 = vunpack.c.l.b16 %v302
    %v332 = vunpack.c.l.b16 %v303
    %v333 = vunpack.c.l.b16 %v304
    %v334 = vunpack.c.l.b16 %v305
    %v335 = vunpack.c.l.b16 %v306
    %v336 = vpack.c.b16 %v323, %v322
    %v337 = vpack.c.b16 %v325, %v324
    %v338 = vpack.c.b16 %v327, %v326
    %v339 = vpack.c.b16 %v329, %v328
    %v340 = vpack.c.b16 %v331, %v330
    %v341 = vpack.c.b16 %v333, %v332
    %v342 = vpack.c.b16 %v335, %v334
    %v351 = vunpack.c.l.b16 %v307
    %v352 = vpack.c.b16 %v351, %v351
    %vm353 = vsmask.f32 7424
    %v355 = vshrl.u32 %v336, 16
    %v357 = vshll.u32 %v336, 16
    %v359 = vrot.slane %v357, 1
    %v360 = vor.u32 %v355, %v359
    %v362 = vshll.u32 %v337, 16
    %v364 = vrot.slane %v362, 1
    %v365 = vsel %vm353, %v360, %v364
    %v366 = vshrl.u32 %v337, 16
    %v368 = vor.u32 %v366, %v364
    %v370 = vshll.u32 %v338, 16
    %v372 = vrot.slane %v370, 1
    %v373 = vsel %vm353, %v368, %v372
    %v374 = vshrl.u32 %v338, 16
    %v376 = vor.u32 %v374, %v372
    %v378 = vshll.u32 %v339, 16
    %v380 = vrot.slane %v378, 1
    %v381 = vsel %vm353, %v376, %v380
    %v382 = vshrl.u32 %v339, 16
    %v384 = vor.u32 %v382, %v380
    %v386 = vshll.u32 %v340, 16
    %v388 = vrot.slane %v386, 1
    %v389 = vsel %vm353, %v384, %v388
    %v390 = vshrl.u32 %v340, 16
    %v392 = vor.u32 %v390, %v388
    %v394 = vshll.u32 %v341, 16
    %v396 = vrot.slane %v394, 1
    %v397 = vsel %vm353, %v392, %v396
    %v398 = vshrl.u32 %v341, 16
    %v400 = vor.u32 %v398, %v396
    %v402 = vshll.u32 %v342, 16
    %v404 = vrot.slane %v402, 1
    %v405 = vsel %vm353, %v400, %v404
    %v406 = vshrl.u32 %v342, 16
    %v408 = vor.u32 %v406, %v404
    %v410 = vshll.u32 %v352, 16
    %v412 = vrot.slane %v410, 1
    %v413 = vsel %vm353, %v408, %v412
    %vm421 = vcmask 1046528
    %v422 = vrot.slane %v336, 1
    %v423 = vrot.slane %v337, 1
    %v424 = vsel %vm421, %v422, %v423
    %v425 = vrot.slane %v338, 1
    %v426 = vsel %vm421, %v423, %v425
    %v427 = vrot.slane %v339, 1
    %v428 = vsel %vm421, %v425, %v427
    %v429 = vrot.slane %v340, 1
    %v430 = vsel %vm421, %v427, %v429
    %v431 = vrot.slane %v341, 1
    %v432 = vsel %vm421, %v429, %v431
    %v433 = vrot.slane %v342, 1
    %v434 = vsel %vm421, %v431, %v433
    %v435 = vrot.slane %v352, 1
    %v436 = vsel %vm421, %v433, %v435
    %vm444 = vsmask.f32 6400
    %v445 = vrot.slane %v355, 1
    %v446 = vrot.slane %v357, 2
    %v447 = vor.u32 %v445, %v446
    %v448 = vrot.slane %v366, 1
    %v449 = vrot.slane %v362, 2
    %v450 = vor.u32 %v448, %v449
    %v451 = vsel %vm444, %v447, %v450
    %v452 = vrot.slane %v374, 1
    %v453 = vrot.slane %v370, 2
    %v454 = vor.u32 %v452, %v453
    %v455 = vsel %vm444, %v450, %v454
    %v456 = vrot.slane %v382, 1
    %v457 = vrot.slane %v378, 2
    %v458 = vor.u32 %v456, %v457
    %v459 = vsel %vm444, %v454, %v458
    %v460 = vrot.slane %v390, 1
    %v461 = vrot.slane %v386, 2
    %v462 = vor.u32 %v460, %v461
    %v463 = vsel %vm444, %v458, %v462
    %v464 = vrot.slane %v398, 1
    %v465 = vrot.slane %v394, 2
    %v466 = vor.u32 %v464, %v465
    %v467 = vsel %vm444, %v462, %v466
    %v468 = vrot.slane %v406, 1
    %v469 = vrot.slane %v402, 2
    %v470 = vor.u32 %v468, %v469
    %v471 = vsel %vm444, %v466, %v470
    %v472 = vshrl.u32 %v352, 16
    %v474 = vrot.slane %v472, 1
    %v475 = vrot.slane %v410, 2
    %v476 = vor.u32 %v474, %v475
    %v477 = vsel %vm444, %v470, %v476
    %vm485 = vcmask 1045504
    %v486 = vrot.slane %v336, 2
    %v487 = vrot.slane %v337, 2
    %v488 = vsel %vm485, %v486, %v487
    %v489 = vrot.slane %v338, 2
    %v490 = vsel %vm485, %v487, %v489
    %v491 = vrot.slane %v339, 2
    %v492 = vsel %vm485, %v489, %v491
    %v493 = vrot.slane %v340, 2
    %v494 = vsel %vm485, %v491, %v493
    %v495 = vrot.slane %v341, 2
    %v496 = vsel %vm485, %v493, %v495
    %v497 = vrot.slane %v342, 2
    %v498 = vsel %vm485, %v495, %v497
    %v499 = vrot.slane %v352, 2
    %v500 = vsel %vm485, %v497, %v499
    %v508 = vld [vmem:[%s0] sm:$0xff]
    %v509 = vld [vmem:[%s0 + $0x8] sm:$0xff]
    %v510 = vld [vmem:[%s0 + $0x10] sm:$0xff]
    %v511 = vld [vmem:[%s0 + $0x18] sm:$0xff]
    %v512 = vld [vmem:[%s0 + $0x20] sm:$0xff]
    %v513 = vld [vmem:[%s0 + $0x28] sm:$0xff]
    %v514 = vld [vmem:[%s0 + $0x30] sm:$0xff]
    %v515 = vld [vmem:[%s0 + $0x38] sm:$0xff]
    %v516 = vld [vmem:[%s0 + $0x40] sm:$0xff]
    %v517 = vld [vmem:[%s0 + $0x48] sm:$0xff]
    %v518 = vld [vmem:[%s0 + $0x50] sm:$0xff]
    %v519 = vld [vmem:[%s0 + $0x58] sm:$0xff]
    %v520 = vld [vmem:[%s0 + $0x60] sm:$0xff]
    %v521 = vld [vmem:[%s0 + $0x68] sm:$0xff]
    %v522 = vld [vmem:[%s0 + $0x70] sm:$0xff]
    %v523 = vld [vmem:[%s0 + $0x78] sm:$0xff]
    %v524 = vld [vmem:[%s0 + $0x80] sm:$0xff]
    %v525 = vld [vmem:[%s0 + $0x88] sm:$0xff]
    %v526 = vld [vmem:[%s0 + $0x90] sm:$0xff]
    %v527 = vld [vmem:[%s0 + $0x98] sm:$0xff]
    %v528 = vld [vmem:[%s0 + $0xa0] sm:$0xff]
    %v529 = vld [vmem:[%s0 + $0xa8] sm:$0xff]
    %v530 = vld [vmem:[%s0 + $0xb0] sm:$0xff]
    %v531 = vld [vmem:[%s0 + $0xb8] sm:$0xff]
    %v532 = vld [vmem:[%s0 + $0xc0] sm:$0xff]
    %v533 = vld [vmem:[%s0 + $0xc8] sm:$0xff]
    %v534 = vld [vmem:[%s0 + $0xd0] sm:$0xff]
    %v535 = vld [vmem:[%s0 + $0xd8] sm:$0xff]
    %v536 = vld [vmem:[%s0 + $0xe0] sm:$0xff]
    %v537 = vld [vmem:[%s0 + $0xe8] sm:$0xff]
    %v538 = vld [vmem:[%s0 + $0xf0] sm:$0xff]
    %v539 = vld [vmem:[%s0 + $0xf8] sm:$0xff]
    %v540 = vld [vmem:[%s0 + $0x100] sm:$0xff]
    %v541 = vld [vmem:[%s0 + $0x108] sm:$0xff]
    %v542 = vld [vmem:[%s0 + $0x110] sm:$0xff]
    %v543 = vld [vmem:[%s0 + $0x118] sm:$0xff]
    %v544 = vld [vmem:[%s0 + $0x120] sm:$0xff]
    %v545 = vld [vmem:[%s0 + $0x128] sm:$0xff]
    %v546 = vld [vmem:[%s0 + $0x130] sm:$0xff]
    %v547 = vld [vmem:[%s0 + $0x138] sm:$0xff]
    %v548 = vld [vmem:[%s0 + $0x140] sm:$0xff]
    %v549 = vld [vmem:[%s0 + $0x148] sm:$0xff]
    %v550 = vld [vmem:[%s0 + $0x150] sm:$0xff]
    %v551 = vld [vmem:[%s0 + $0x158] sm:$0xff]
    %v552 = vld [vmem:[%s0 + $0x160] sm:$0xff]
    %v553 = vld [vmem:[%s0 + $0x168] sm:$0xff]
    %v554 = vld [vmem:[%s0 + $0x170] sm:$0xff]
    %v555 = vld [vmem:[%s0 + $0x178] sm:$0xff]
    %v556 = vld [vmem:[%s0 + $0x180] sm:$0xff]
    %v557 = vld [vmem:[%s0 + $0x188] sm:$0xff]
    %v558 = vld [vmem:[%s0 + $0x190] sm:$0xff]
    %v559 = vld [vmem:[%s0 + $0x198] sm:$0xff]
    %v560 = vld [vmem:[%s0 + $0x1a0] sm:$0xff]
    %v561 = vld [vmem:[%s0 + $0x1a8] sm:$0xff]
    %v562 = vld [vmem:[%s0 + $0x1b0] sm:$0xff]
    %v563 = vld [vmem:[%s0 + $0x1b8] sm:$0xff]
    %v564 = vld [vmem:[%s0 + $0x1c0] sm:$0xff]
    %v565 = vld [vmem:[%s0 + $0x1c8] sm:$0xff]
    %v566 = vld [vmem:[%s0 + $0x1d0] sm:$0xff]
    %v567 = vld [vmem:[%s0 + $0x1d8] sm:$0xff]
    %v568 = vld [vmem:[%s0 + $0x1e0] sm:$0xff]
    %v569 = vld [vmem:[%s0 + $0x1e8] sm:$0xff]
    %v570 = vld [vmem:[%s0 + $0x1f0] sm:$0xff]
    %v571 = vld [vmem:[%s0 + $0x1f8] sm:$0xff]
    %v572 = vld [vmem:[%s0 + $0x200] sm:$0xff]
    %v573 = vld [vmem:[%s0 + $0x208] sm:$0xff]
    %v574 = vld [vmem:[%s0 + $0x210] sm:$0xff]
    %v575 = vld [vmem:[%s0 + $0x218] sm:$0xff]
    %v576 = vld [vmem:[%s0 + $0x220] sm:$0xff]
    %v577 = vld [vmem:[%s0 + $0x228] sm:$0xff]
    %v578 = vld [vmem:[%s0 + $0x230] sm:$0xff]
    %v579 = vld [vmem:[%s0 + $0x238] sm:$0xff]
    %v580 = vld [vmem:[%s0 + $0x240] sm:$0xff]
    %v581 = vld [vmem:[%s0 + $0x248] sm:$0xff]
    %v582 = vld [vmem:[%s0 + $0x250] sm:$0xff]
    %v583 = vld [vmem:[%s0 + $0x258] sm:$0xff]
    %v584 = vld [vmem:[%s0 + $0x260] sm:$0xff]
    %v585 = vld [vmem:[%s0 + $0x268] sm:$0xff]
    %v586 = vld [vmem:[%s0 + $0x270] sm:$0xff]
    %v587 = vld [vmem:[%s0 + $0x278] sm:$0xff]
    %v668 = vunpack.c.l.b16 %v508
    %v669 = vunpack.c.h.b16 %v508
    %v670 = vunpack.c.l.b16 %v509
    %v671 = vunpack.c.h.b16 %v509
    %v672 = vunpack.c.l.b16 %v510
    %v673 = vunpack.c.h.b16 %v510
    %v674 = vunpack.c.l.b16 %v511
    %v675 = vunpack.c.h.b16 %v511
    %v676 = vunpack.c.l.b16 %v512
    %v677 = vunpack.c.h.b16 %v512
    %v678 = vunpack.c.l.b16 %v513
    %v679 = vunpack.c.h.b16 %v513
    %v680 = vunpack.c.l.b16 %v514
    %v681 = vunpack.c.h.b16 %v514
    %v682 = vunpack.c.l.b16 %v515
    %v683 = vunpack.c.h.b16 %v515
    %v684 = vunpack.c.l.b16 %v516
    %v685 = vunpack.c.h.b16 %v516
    %v686 = vunpack.c.l.b16 %v517
    %v687 = vunpack.c.h.b16 %v517
    %v688 = vunpack.c.l.b16 %v518
    %v689 = vunpack.c.h.b16 %v518
    %v690 = vunpack.c.l.b16 %v519
    %v691 = vunpack.c.h.b16 %v519
    %v692 = vunpack.c.l.b16 %v520
    %v693 = vunpack.c.h.b16 %v520
    %v694 = vunpack.c.l.b16 %v521
    %v695 = vunpack.c.h.b16 %v521
    %v696 = vunpack.c.l.b16 %v522
    %v697 = vunpack.c.h.b16 %v522
    %v698 = vunpack.c.l.b16 %v523
    %v699 = vunpack.c.h.b16 %v523
    %v700 = vunpack.c.l.b16 %v524
    %v701 = vunpack.c.h.b16 %v524
    %v702 = vunpack.c.l.b16 %v525
    %v703 = vunpack.c.h.b16 %v525
    %v704 = vunpack.c.l.b16 %v526
    %v705 = vunpack.c.h.b16 %v526
    %v706 = vunpack.c.l.b16 %v527
    %v707 = vunpack.c.h.b16 %v527
    %v708 = vunpack.c.l.b16 %v528
    %v709 = vunpack.c.h.b16 %v528
    %v710 = vunpack.c.l.b16 %v529
    %v711 = vunpack.c.h.b16 %v529
    %v712 = vunpack.c.l.b16 %v530
    %v713 = vunpack.c.h.b16 %v530
    %v714 = vunpack.c.l.b16 %v531
    %v715 = vunpack.c.h.b16 %v531
    %v716 = vunpack.c.l.b16 %v532
    %v717 = vunpack.c.h.b16 %v532
    %v718 = vunpack.c.l.b16 %v533
    %v719 = vunpack.c.h.b16 %v533
    %v720 = vunpack.c.l.b16 %v534
    %v721 = vunpack.c.h.b16 %v534
    %v722 = vunpack.c.l.b16 %v535
    %v723 = vunpack.c.h.b16 %v535
    %v724 = vunpack.c.l.b16 %v536
    %v725 = vunpack.c.h.b16 %v536
    %v726 = vunpack.c.l.b16 %v537
    %v727 = vunpack.c.h.b16 %v537
    %v728 = vunpack.c.l.b16 %v538
    %v729 = vunpack.c.h.b16 %v538
    %v730 = vunpack.c.l.b16 %v539
    %v731 = vunpack.c.h.b16 %v539
    %v732 = vunpack.c.l.b16 %v540
    %v733 = vunpack.c.h.b16 %v540
    %v734 = vunpack.c.l.b16 %v541
    %v735 = vunpack.c.h.b16 %v541
    %v736 = vunpack.c.l.b16 %v542
    %v737 = vunpack.c.h.b16 %v542
    %v738 = vunpack.c.l.b16 %v543
    %v739 = vunpack.c.h.b16 %v543
    %v740 = vunpack.c.l.b16 %v544
    %v741 = vunpack.c.h.b16 %v544
    %v742 = vunpack.c.l.b16 %v545
    %v743 = vunpack.c.h.b16 %v545
    %v744 = vunpack.c.l.b16 %v546
    %v745 = vunpack.c.h.b16 %v546
    %v746 = vunpack.c.l.b16 %v547
    %v747 = vunpack.c.h.b16 %v547
    %v748 = vunpack.c.l.b16 %v548
    %v749 = vunpack.c.h.b16 %v548
    %v750 = vunpack.c.l.b16 %v549
    %v751 = vunpack.c.h.b16 %v549
    %v752 = vunpack.c.l.b16 %v550
    %v753 = vunpack.c.h.b16 %v550
    %v754 = vunpack.c.l.b16 %v551
    %v755 = vunpack.c.h.b16 %v551
    %v756 = vunpack.c.l.b16 %v552
    %v757 = vunpack.c.h.b16 %v552
    %v758 = vunpack.c.l.b16 %v553
    %v759 = vunpack.c.h.b16 %v553
    %v760 = vunpack.c.l.b16 %v554
    %v761 = vunpack.c.h.b16 %v554
    %v762 = vunpack.c.l.b16 %v555
    %v763 = vunpack.c.h.b16 %v555
    %v764 = vunpack.c.l.b16 %v556
    %v765 = vunpack.c.h.b16 %v556
    %v766 = vunpack.c.l.b16 %v557
    %v767 = vunpack.c.h.b16 %v557
    %v768 = vunpack.c.l.b16 %v558
    %v769 = vunpack.c.h.b16 %v558
    %v770 = vunpack.c.l.b16 %v559
    %v771 = vunpack.c.h.b16 %v559
    %v772 = vunpack.c.l.b16 %v560
    %v773 = vunpack.c.h.b16 %v560
    %v774 = vunpack.c.l.b16 %v561
    %v775 = vunpack.c.h.b16 %v561
    %v776 = vunpack.c.l.b16 %v562
    %v777 = vunpack.c.h.b16 %v562
    %v778 = vunpack.c.l.b16 %v563
    %v779 = vunpack.c.h.b16 %v563
    %v780 = vunpack.c.l.b16 %v564
    %v781 = vunpack.c.h.b16 %v564
    %v782 = vunpack.c.l.b16 %v565
    %v783 = vunpack.c.h.b16 %v565
    %v784 = vunpack.c.l.b16 %v566
    %v785 = vunpack.c.h.b16 %v566
    %v786 = vunpack.c.l.b16 %v567
    %v787 = vunpack.c.h.b16 %v567
    %v788 = vunpack.c.l.b16 %v568
    %v789 = vunpack.c.h.b16 %v568
    %v790 = vunpack.c.l.b16 %v569
    %v791 = vunpack.c.h.b16 %v569
    %v792 = vunpack.c.l.b16 %v570
    %v793 = vunpack.c.h.b16 %v570
    %v794 = vunpack.c.l.b16 %v571
    %v795 = vunpack.c.h.b16 %v571
    %v796 = vunpack.c.l.b16 %v572
    %v797 = vunpack.c.h.b16 %v572
    %v798 = vunpack.c.l.b16 %v573
    %v799 = vunpack.c.h.b16 %v573
    %v800 = vunpack.c.l.b16 %v574
    %v801 = vunpack.c.h.b16 %v574
    %v802 = vunpack.c.l.b16 %v575
    %v803 = vunpack.c.h.b16 %v575
    %v804 = vunpack.c.l.b16 %v576
    %v805 = vunpack.c.h.b16 %v576
    %v806 = vunpack.c.l.b16 %v577
    %v807 = vunpack.c.h.b16 %v577
    %v808 = vunpack.c.l.b16 %v578
    %v809 = vunpack.c.h.b16 %v578
    %v810 = vunpack.c.l.b16 %v579
    %v811 = vunpack.c.h.b16 %v579
    %v812 = vunpack.c.l.b16 %v580
    %v813 = vunpack.c.h.b16 %v580
    %v814 = vunpack.c.l.b16 %v581
    %v815 = vunpack.c.h.b16 %v581
    %v816 = vunpack.c.l.b16 %v582
    %v817 = vunpack.c.h.b16 %v582
    %v818 = vunpack.c.l.b16 %v583
    %v819 = vunpack.c.h.b16 %v583
    %v820 = vunpack.c.l.b16 %v584
    %v821 = vunpack.c.h.b16 %v584
    %v822 = vunpack.c.l.b16 %v585
    %v823 = vunpack.c.h.b16 %v585
    %v824 = vunpack.c.l.b16 %v586
    %v825 = vunpack.c.h.b16 %v586
    %v826 = vunpack.c.l.b16 %v587
    %v827 = vunpack.c.h.b16 %v587
    %v828 = vpack.c.b16 %v670, %v668
    %v829 = vpack.c.b16 %v671, %v669
    %v830 = vpack.c.b16 %v674, %v672
    %v831 = vpack.c.b16 %v675, %v673
    %v832 = vpack.c.b16 %v678, %v676
    %v833 = vpack.c.b16 %v679, %v677
    %v834 = vpack.c.b16 %v682, %v680
    %v835 = vpack.c.b16 %v683, %v681
    %v836 = vpack.c.b16 %v686, %v684
    %v837 = vpack.c.b16 %v687, %v685
    %v838 = vpack.c.b16 %v690, %v688
    %v839 = vpack.c.b16 %v691, %v689
    %v840 = vpack.c.b16 %v694, %v692
    %v841 = vpack.c.b16 %v695, %v693
    %v842 = vpack.c.b16 %v698, %v696
    %v843 = vpack.c.b16 %v699, %v697
    %v844 = vpack.c.b16 %v702, %v700
    %v845 = vpack.c.b16 %v703, %v701
    %v846 = vpack.c.b16 %v706, %v704
    %v847 = vpack.c.b16 %v707, %v705
    %v848 = vpack.c.b16 %v710, %v708
    %v849 = vpack.c.b16 %v711, %v709
    %v850 = vpack.c.b16 %v714, %v712
    %v851 = vpack.c.b16 %v715, %v713
    %v852 = vpack.c.b16 %v718, %v716
    %v853 = vpack.c.b16 %v719, %v717
    %v854 = vpack.c.b16 %v722, %v720
    %v855 = vpack.c.b16 %v723, %v721
    %v856 = vpack.c.b16 %v726, %v724
    %v857 = vpack.c.b16 %v727, %v725
    %v858 = vpack.c.b16 %v730, %v728
    %v859 = vpack.c.b16 %v731, %v729
    %v860 = vpack.c.b16 %v734, %v732
    %v861 = vpack.c.b16 %v735, %v733
    %v862 = vpack.c.b16 %v738, %v736
    %v863 = vpack.c.b16 %v739, %v737
    %v864 = vpack.c.b16 %v742, %v740
    %v865 = vpack.c.b16 %v743, %v741
    %v866 = vpack.c.b16 %v746, %v744
    %v867 = vpack.c.b16 %v747, %v745
    %v868 = vpack.c.b16 %v750, %v748
    %v869 = vpack.c.b16 %v751, %v749
    %v870 = vpack.c.b16 %v754, %v752
    %v871 = vpack.c.b16 %v755, %v753
    %v872 = vpack.c.b16 %v758, %v756
    %v873 = vpack.c.b16 %v759, %v757
    %v874 = vpack.c.b16 %v762, %v760
    %v875 = vpack.c.b16 %v763, %v761
    %v876 = vpack.c.b16 %v766, %v764
    %v877 = vpack.c.b16 %v767, %v765
    %v878 = vpack.c.b16 %v770, %v768
    %v879 = vpack.c.b16 %v771, %v769
    %v880 = vpack.c.b16 %v774, %v772
    %v881 = vpack.c.b16 %v775, %v773
    %v882 = vpack.c.b16 %v778, %v776
    %v883 = vpack.c.b16 %v779, %v777
    %v884 = vpack.c.b16 %v782, %v780
    %v885 = vpack.c.b16 %v783, %v781
    %v886 = vpack.c.b16 %v786, %v784
    %v887 = vpack.c.b16 %v787, %v785
    %v888 = vpack.c.b16 %v790, %v788
    %v889 = vpack.c.b16 %v791, %v789
    %v890 = vpack.c.b16 %v794, %v792
    %v891 = vpack.c.b16 %v795, %v793
    %v892 = vpack.c.b16 %v798, %v796
    %v893 = vpack.c.b16 %v799, %v797
    %v894 = vpack.c.b16 %v802, %v800
    %v895 = vpack.c.b16 %v803, %v801
    %v896 = vpack.c.b16 %v806, %v804
    %v897 = vpack.c.b16 %v807, %v805
    %v898 = vpack.c.b16 %v810, %v808
    %v899 = vpack.c.b16 %v811, %v809
    %v900 = vpack.c.b16 %v814, %v812
    %v901 = vpack.c.b16 %v815, %v813
    %v902 = vpack.c.b16 %v818, %v816
    %v903 = vpack.c.b16 %v819, %v817
    %v904 = vpack.c.b16 %v822, %v820
    %v905 = vpack.c.b16 %v823, %v821
    %v906 = vpack.c.b16 %v826, %v824
    %v907 = vpack.c.b16 %v827, %v825
    %988 = vmatprep.subr.bf16.mxu0 %v829
    %989 = vmatpush1.bf16.msra.mxu0 %v828
    %990 = vmatprep.subr.bf16.mxu0 %v831
    %991 = vmatpush1.bf16.msra.mxu0 %v830
    %992 = vmatprep.subr.bf16.mxu0 %v833
    %993 = vmatpush1.bf16.msra.mxu0 %v832
    %994 = vmatprep.subr.bf16.mxu0 %v835
    %995 = vmatpush1.bf16.msra.mxu0 %v834
    %996 = vmatprep.subr.bf16.mxu0 %v837
    %997 = vmatpush1.bf16.msra.mxu0 %v836
    %998 = vmatprep.subr.bf16.mxu0 %v839
    %999 = vmatpush1.bf16.msra.mxu0 %v838
    %1000 = vmatprep.subr.bf16.mxu0 %v841
    %1001 = vmatpush1.bf16.msra.mxu0 %v840
    %1002 = vmatprep.subr.bf16.mxu0 %v843
    %1003 = vmatpush1.bf16.msra.mxu0 %v842
    %1004 = vmatprep.subr.bf16.mxu0 %v845
    %1005 = vmatpush1.bf16.msra.mxu0 %v844
    %1006 = vmatprep.subr.bf16.mxu0 %v847
    %1007 = vmatpush1.bf16.msra.mxu0 %v846
    %1008 = vmatprep.subr.bf16.mxu0 %v849
    %1009 = vmatpush1.bf16.msra.mxu0 %v848
    %1010 = vmatprep.subr.bf16.mxu0 %v851
    %1011 = vmatpush1.bf16.msra.mxu0 %v850
    %1012 = vmatprep.subr.bf16.mxu0 %v853
    %1013 = vmatpush1.bf16.msra.mxu0 %v852
    %1014 = vmatprep.subr.bf16.mxu0 %v855
    %1015 = vmatpush1.bf16.msra.mxu0 %v854
    %1016 = vmatprep.subr.bf16.mxu0 %v857
    %1017 = vmatpush1.bf16.msra.mxu0 %v856
    %1018 = vmatprep.subr.bf16.mxu0 %v859
    %1019 = vmatpush1.bf16.msra.mxu0 %v858
    %1020 = vmatprep.mubr.bf16.mxu0 %v365
    %1021 = vmatmul.mubr.bf16.gmra.mrb[0].mxu0 %v336
    %v1022 = vpop.f32.mrb[0].mxu0
    %v1023 = vadd.f32 0.0, %v1022
    %v1024 = vpop.f32.mrb[0].mxu0
    %v1025 = vadd.f32 0.0, %v1024
    %v1026 = vpop.f32.mrb[0].mxu0
    %v1027 = vadd.f32 0.0, %v1026
    %v1028 = vpop.f32.mrb[0].mxu0
    %v1029 = vadd.f32 0.0, %v1028
    %1030 = vmatprep.mubr.bf16.mxu0 %v373
    %1031 = vmatmul.mubr.bf16.gmra.mrb[0].mxu0 %v337
    %v1032 = vpop.f32.mrb[0].mxu0
    %v1033 = vadd.f32 0.0, %v1032
    %v1034 = vpop.f32.mrb[0].mxu0
    %v1035 = vadd.f32 0.0, %v1034
    %v1036 = vpop.f32.mrb[0].mxu0
    %v1037 = vadd.f32 0.0, %v1036
    %v1038 = vpop.f32.mrb[0].mxu0
    %v1039 = vadd.f32 0.0, %v1038
    %1040 = vmatprep.mubr.bf16.mxu0 %v381
    %1041 = vmatmul.mubr.bf16.gmra.mrb[0].mxu0 %v338
    %v1042 = vpop.f32.mrb[0].mxu0
    %v1043 = vadd.f32 0.0, %v1042
    %v1044 = vpop.f32.mrb[0].mxu0
    %v1045 = vadd.f32 0.0, %v1044
    %v1046 = vpop.f32.mrb[0].mxu0
    %v1047 = vadd.f32 0.0, %v1046
    %v1048 = vpop.f32.mrb[0].mxu0
    %v1049 = vadd.f32 0.0, %v1048
    %1050 = vmatprep.mubr.bf16.mxu0 %v389
    %1051 = vmatmul.mubr.bf16.gmra.mrb[0].mxu0 %v339
    %v1052 = vpop.f32.mrb[0].mxu0
    %v1053 = vadd.f32 0.0, %v1052
    %v1054 = vpop.f32.mrb[0].mxu0
    %v1055 = vadd.f32 0.0, %v1054
    %v1056 = vpop.f32.mrb[0].mxu0
    %v1057 = vadd.f32 0.0, %v1056
    %v1058 = vpop.f32.mrb[0].mxu0
    %v1059 = vadd.f32 0.0, %v1058
    %1060 = vmatprep.mubr.bf16.mxu0 %v397
    %1061 = vmatmul.mubr.bf16.gmra.mrb[0].mxu0 %v340
    %v1062 = vpop.f32.mrb[0].mxu0
    %v1063 = vadd.f32 0.0, %v1062
    %v1064 = vpop.f32.mrb[0].mxu0
    %v1065 = vadd.f32 0.0, %v1064
    %v1066 = vpop.f32.mrb[0].mxu0
    %v1067 = vadd.f32 0.0, %v1066
    %v1068 = vpop.f32.mrb[0].mxu0
    %v1069 = vadd.f32 0.0, %v1068
    %1070 = vmatprep.mubr.bf16.mxu0 %v405
    %1071 = vmatmul.mubr.bf16.gmra.mrb[0].mxu0 %v341
    %v1072 = vpop.f32.mrb[0].mxu0
    %v1073 = vadd.f32 0.0, %v1072
    %v1074 = vpop.f32.mrb[0].mxu0
    %v1075 = vadd.f32 0.0, %v1074
    %v1076 = vpop.f32.mrb[0].mxu0
    %v1077 = vadd.f32 0.0, %v1076
    %v1078 = vpop.f32.mrb[0].mxu0
    %v1079 = vadd.f32 0.0, %v1078
    %1080 = vmatprep.mubr.bf16.mxu0 %v413
    %1081 = vmatmul.mubr.bf16.gmra.mrb[0].mxu0 %v342
    %v1082 = vpop.f32.mrb[0].mxu0
    %v1083 = vadd.f32 0.0, %v1082
    %v1084 = vpop.f32.mrb[0].mxu0
    %v1085 = vadd.f32 0.0, %v1084
    %v1086 = vpop.f32.mrb[0].mxu0
    %v1087 = vadd.f32 0.0, %v1086
    %v1088 = vpop.f32.mrb[0].mxu0
    %v1089 = vadd.f32 0.0, %v1088
    %1090 = vdwg.mxu0
    %1091 = vmatprep.subr.bf16.mxu0 %v861
    %1092 = vmatpush1.bf16.msra.mxu0 %v860
    %1093 = vmatprep.subr.bf16.mxu0 %v863
    %1094 = vmatpush1.bf16.msra.mxu0 %v862
    %1095 = vmatprep.subr.bf16.mxu0 %v865
    %1096 = vmatpush1.bf16.msra.mxu0 %v864
    %1097 = vmatprep.subr.bf16.mxu0 %v867
    %1098 = vmatpush1.bf16.msra.mxu0 %v866
    %1099 = vmatprep.subr.bf16.mxu0 %v869
    %1100 = vmatpush1.bf16.msra.mxu0 %v868
    %1101 = vmatprep.subr.bf16.mxu0 %v871
    %1102 = vmatpush1.bf16.msra.mxu0 %v870
    %1103 = vmatprep.subr.bf16.mxu0 %v873
    %1104 = vmatpush1.bf16.msra.mxu0 %v872
    %1105 = vmatprep.subr.bf16.mxu0 %v875
    %1106 = vmatpush1.bf16.msra.mxu0 %v874
    %1107 = vmatprep.subr.bf16.mxu0 %v877
    %1108 = vmatpush1.bf16.msra.mxu0 %v876
    %1109 = vmatprep.subr.bf16.mxu0 %v879
    %1110 = vmatpush1.bf16.msra.mxu0 %v878
    %1111 = vmatprep.subr.bf16.mxu0 %v881
    %1112 = vmatpush1.bf16.msra.mxu0 %v880
    %1113 = vmatprep.subr.bf16.mxu0 %v883
    %1114 = vmatpush1.bf16.msra.mxu0 %v882
    %1115 = vmatprep.subr.bf16.mxu0 %v885
    %1116 = vmatpush1.bf16.msra.mxu0 %v884
    %1117 = vmatprep.subr.bf16.mxu0 %v887
    %1118 = vmatpush1.bf16.msra.mxu0 %v886
    %1119 = vmatprep.subr.bf16.mxu0 %v889
    %1120 = vmatpush1.bf16.msra.mxu0 %v888
    %1121 = vmatprep.subr.bf16.mxu0 %v891
    %1122 = vmatpush1.bf16.msra.mxu0 %v890
    %1123 = vmatprep.mubr.bf16.mxu0 %v451
    %1124 = vmatmul.mubr.bf16.gmra.mrb[0].mxu0 %v424
    %v1125 = vpop.f32.mrb[0].mxu0
    %v1126 = vadd.f32 %v1023, %v1125
    %v1127 = vpop.f32.mrb[0].mxu0
    %v1128 = vadd.f32 %v1025, %v1127
    %v1129 = vpop.f32.mrb[0].mxu0
    %v1130 = vadd.f32 %v1027, %v1129
    %v1131 = vpop.f32.mrb[0].mxu0
    %v1132 = vadd.f32 %v1029, %v1131
    %1133 = vmatprep.mubr.bf16.mxu0 %v455
    %1134 = vmatmul.mubr.bf16.gmra.mrb[0].mxu0 %v426
    %v1135 = vpop.f32.mrb[0].mxu0
    %v1136 = vadd.f32 %v1033, %v1135
    %v1137 = vpop.f32.mrb[0].mxu0
    %v1138 = vadd.f32 %v1035, %v1137
    %v1139 = vpop.f32.mrb[0].mxu0
    %v1140 = vadd.f32 %v1037, %v1139
    %v1141 = vpop.f32.mrb[0].mxu0
    %v1142 = vadd.f32 %v1039, %v1141
    %1143 = vmatprep.mubr.bf16.mxu0 %v459
    %1144 = vmatmul.mubr.bf16.gmra.mrb[0].mxu0 %v428
    %v1145 = vpop.f32.mrb[0].mxu0
    %v1146 = vadd.f32 %v1043, %v1145
    %v1147 = vpop.f32.mrb[0].mxu0
    %v1148 = vadd.f32 %v1045, %v1147
    %v1149 = vpop.f32.mrb[0].mxu0
    %v1150 = vadd.f32 %v1047, %v1149
    %v1151 = vpop.f32.mrb[0].mxu0
    %v1152 = vadd.f32 %v1049, %v1151
    %1153 = vmatprep.mubr.bf16.mxu0 %v463
    %1154 = vmatmul.mubr.bf16.gmra.mrb[0].mxu0 %v430
    %v1155 = vpop.f32.mrb[0].mxu0
    %v1156 = vadd.f32 %v1053, %v1155
    %v1157 = vpop.f32.mrb[0].mxu0
    %v1158 = vadd.f32 %v1055, %v1157
    %v1159 = vpop.f32.mrb[0].mxu0
    %v1160 = vadd.f32 %v1057, %v1159
    %v1161 = vpop.f32.mrb[0].mxu0
    %v1162 = vadd.f32 %v1059, %v1161
    %1163 = vmatprep.mubr.bf16.mxu0 %v467
    %1164 = vmatmul.mubr.bf16.gmra.mrb[0].mxu0 %v432
    %v1165 = vpop.f32.mrb[0].mxu0
    %v1166 = vadd.f32 %v1063, %v1165
    %v1167 = vpop.f32.mrb[0].mxu0
    %v1168 = vadd.f32 %v1065, %v1167
    %v1169 = vpop.f32.mrb[0].mxu0
    %v1170 = vadd.f32 %v1067, %v1169
    %v1171 = vpop.f32.mrb[0].mxu0
    %v1172 = vadd.f32 %v1069, %v1171
    %1173 = vmatprep.mubr.bf16.mxu0 %v471
    %1174 = vmatmul.mubr.bf16.gmra.mrb[0].mxu0 %v434
    %v1175 = vpop.f32.mrb[0].mxu0
    %v1176 = vadd.f32 %v1073, %v1175
    %v1177 = vpop.f32.mrb[0].mxu0
    %v1178 = vadd.f32 %v1075, %v1177
    %v1179 = vpop.f32.mrb[0].mxu0
    %v1180 = vadd.f32 %v1077, %v1179
    %v1181 = vpop.f32.mrb[0].mxu0
    %v1182 = vadd.f32 %v1079, %v1181
    %1183 = vmatprep.mubr.bf16.mxu0 %v477
    %1184 = vmatmul.mubr.bf16.gmra.mrb[0].mxu0 %v436
    %v1185 = vpop.f32.mrb[0].mxu0
    %v1186 = vadd.f32 %v1083, %v1185
    %v1187 = vpop.f32.mrb[0].mxu0
    %v1188 = vadd.f32 %v1085, %v1187
    %v1189 = vpop.f32.mrb[0].mxu0
    %v1190 = vadd.f32 %v1087, %v1189
    %v1191 = vpop.f32.mrb[0].mxu0
    %v1192 = vadd.f32 %v1089, %v1191
    %1193 = vdwg.mxu0
    %1194 = vmatprep.subr.bf16.mxu0 %v893
    %1195 = vmatpush1.bf16.msra.mxu0 %v892
    %1196 = vmatprep.subr.bf16.mxu0 %v895
    %1197 = vmatpush1.bf16.msra.mxu0 %v894
    %1198 = vmatprep.subr.bf16.mxu0 %v897
    %1199 = vmatpush1.bf16.msra.mxu0 %v896
    %1200 = vmatprep.subr.bf16.mxu0 %v899
    %1201 = vmatpush1.bf16.msra.mxu0 %v898
    %1202 = vmatprep.subr.bf16.mxu0 %v901
    %1203 = vmatpush1.bf16.msra.mxu0 %v900
    %1204 = vmatprep.subr.bf16.mxu0 %v903
    %1205 = vmatpush1.bf16.msra.mxu0 %v902
    %1206 = vmatprep.subr.bf16.mxu0 %v905
    %1207 = vmatpush1.bf16.msra.mxu0 %v904
    %1208 = vmatprep.subr.bf16.mxu0 %v907
    %1209 = vmatpush1.bf16.msra.mxu0 %v906
    %1210 = vmatprep.subr.bf16.mxu0 0
    %1211 = vmatpush1.bf16.msra.mxu0 0
    %1212 = vmatprep.subr.bf16.mxu0 0
    %1213 = vmatpush1.bf16.msra.mxu0 0
    %1214 = vmatprep.subr.bf16.mxu0 0
    %1215 = vmatpush1.bf16.msra.mxu0 0
    %1216 = vmatprep.subr.bf16.mxu0 0
    %1217 = vmatpush1.bf16.msra.mxu0 0
    %1218 = vmatprep.subr.bf16.mxu0 0
    %1219 = vmatpush1.bf16.msra.mxu0 0
    %1220 = vmatprep.subr.bf16.mxu0 0
    %1221 = vmatpush1.bf16.msra.mxu0 0
    %1222 = vmatprep.subr.bf16.mxu0 0
    %1223 = vmatpush1.bf16.msra.mxu0 0
    %1224 = vmatprep.subr.bf16.mxu0 0
    %1225 = vmatpush1.bf16.msra.mxu0 0
    %1226 = vmatprep.mubr.bf16.mxu0 0
    %1227 = vmatmul.mubr.bf16.gmra.mrb[0].mxu0 %v488
    %v1228 = vpop.f32.mrb[0].mxu0
    %v1229 = vadd.f32 %v1126, %v1228
    %v1230 = vpop.f32.mrb[0].mxu0
    %v1231 = vadd.f32 %v1128, %v1230
    %v1232 = vpop.f32.mrb[0].mxu0
    %v1233 = vadd.f32 %v1130, %v1232
    %v1234 = vpop.f32.mrb[0].mxu0
    %v1235 = vadd.f32 %v1132, %v1234
    %1236 = vmatprep.mubr.bf16.mxu0 0
    %1237 = vmatmul.mubr.bf16.gmra.mrb[0].mxu0 %v490
    %v1238 = vpop.f32.mrb[0].mxu0
    %v1239 = vadd.f32 %v1136, %v1238
    %v1240 = vpop.f32.mrb[0].mxu0
    %v1241 = vadd.f32 %v1138, %v1240
    %v1242 = vpop.f32.mrb[0].mxu0
    %v1243 = vadd.f32 %v1140, %v1242
    %v1244 = vpop.f32.mrb[0].mxu0
    %v1245 = vadd.f32 %v1142, %v1244
    %1246 = vmatprep.mubr.bf16.mxu0 0
    %1247 = vmatmul.mubr.bf16.gmra.mrb[0].mxu0 %v492
    %v1248 = vpop.f32.mrb[0].mxu0
    %v1249 = vadd.f32 %v1146, %v1248
    %v1250 = vpop.f32.mrb[0].mxu0
    %v1251 = vadd.f32 %v1148, %v1250
    %v1252 = vpop.f32.mrb[0].mxu0
    %v1253 = vadd.f32 %v1150, %v1252
    %v1254 = vpop.f32.mrb[0].mxu0
    %v1255 = vadd.f32 %v1152, %v1254
    %1256 = vmatprep.mubr.bf16.mxu0 0
    %1257 = vmatmul.mubr.bf16.gmra.mrb[0].mxu0 %v494
    %v1258 = vpop.f32.mrb[0].mxu0
    %v1259 = vadd.f32 %v1156, %v1258
    %v1260 = vpop.f32.mrb[0].mxu0
    %v1261 = vadd.f32 %v1158, %v1260
    %v1262 = vpop.f32.mrb[0].mxu0
    %v1263 = vadd.f32 %v1160, %v1262
    %v1264 = vpop.f32.mrb[0].mxu0
    %v1265 = vadd.f32 %v1162, %v1264
    %1266 = vmatprep.mubr.bf16.mxu0 0
    %1267 = vmatmul.mubr.bf16.gmra.mrb[0].mxu0 %v496
    %v1268 = vpop.f32.mrb[0].mxu0
    %v1269 = vadd.f32 %v1166, %v1268
    %v1270 = vpop.f32.mrb[0].mxu0
    %v1271 = vadd.f32 %v1168, %v1270
    %v1272 = vpop.f32.mrb[0].mxu0
    %v1273 = vadd.f32 %v1170, %v1272
    %v1274 = vpop.f32.mrb[0].mxu0
    %v1275 = vadd.f32 %v1172, %v1274
    %1276 = vmatprep.mubr.bf16.mxu0 0
    %1277 = vmatmul.mubr.bf16.gmra.mrb[0].mxu0 %v498
    %v1278 = vpop.f32.mrb[0].mxu0
    %v1279 = vadd.f32 %v1176, %v1278
    %v1280 = vpop.f32.mrb[0].mxu0
    %v1281 = vadd.f32 %v1178, %v1280
    %v1282 = vpop.f32.mrb[0].mxu0
    %v1283 = vadd.f32 %v1180, %v1282
    %v1284 = vpop.f32.mrb[0].mxu0
    %v1285 = vadd.f32 %v1182, %v1284
    %1286 = vmatprep.mubr.bf16.mxu0 0
    %1287 = vmatmul.mubr.bf16.gmra.mrb[0].mxu0 %v500
    %v1288 = vpop.f32.mrb[0].mxu0
    %v1289 = vadd.f32 %v1186, %v1288
    %v1290 = vpop.f32.mrb[0].mxu0
    %v1291 = vadd.f32 %v1188, %v1290
    %v1292 = vpop.f32.mrb[0].mxu0
    %v1293 = vadd.f32 %v1190, %v1292
    %v1294 = vpop.f32.mrb[0].mxu0
    %v1295 = vadd.f32 %v1192, %v1294
    %1296 = vdwg.mxu0
    %v1297 = vmax.f32 %v1229, %v1231
    %v1298 = vmax.f32 %v1233, %v1235
    %v1299 = vmax.f32 %v1239, %v1241
    %v1300 = vmax.f32 %v1243, %v1245
    %v1301 = vmax.f32 %v1249, %v1251
    %v1302 = vmax.f32 %v1253, %v1255
    %v1303 = vmax.f32 %v1259, %v1261
    %v1304 = vmax.f32 %v1263, %v1265
    %v1305 = vmax.f32 %v1269, %v1271
    %v1306 = vmax.f32 %v1273, %v1275
    %v1307 = vmax.f32 %v1279, %v1281
    %v1308 = vmax.f32 %v1283, %v1285
    %v1309 = vmax.f32 %v1289, %v1291
    %v1310 = vmax.f32 %v1293, %v1295
    %vm1325 = vcmask 1046528
    %v1326 = vrot.slane %v1297, 1
    %v1327 = vrot.slane %v1298, 1
    %v1328 = vsel %vm1325, %v1326, %v1327
    %v1329 = vrot.slane %v1299, 1
    %v1330 = vsel %vm1325, %v1327, %v1329
    %v1331 = vrot.slane %v1300, 1
    %v1332 = vsel %vm1325, %v1329, %v1331
    %v1333 = vrot.slane %v1301, 1
    %v1334 = vsel %vm1325, %v1331, %v1333
    %v1335 = vrot.slane %v1302, 1
    %v1336 = vsel %vm1325, %v1333, %v1335
    %v1337 = vrot.slane %v1303, 1
    %v1338 = vsel %vm1325, %v1335, %v1337
    %v1339 = vrot.slane %v1304, 1
    %v1340 = vsel %vm1325, %v1337, %v1339
    %v1341 = vrot.slane %v1305, 1
    %v1342 = vsel %vm1325, %v1339, %v1341
    %v1343 = vrot.slane %v1306, 1
    %v1344 = vsel %vm1325, %v1341, %v1343
    %v1345 = vrot.slane %v1307, 1
    %v1346 = vsel %vm1325, %v1343, %v1345
    %v1347 = vrot.slane %v1308, 1
    %v1348 = vsel %vm1325, %v1345, %v1347
    %v1349 = vrot.slane %v1309, 1
    %v1350 = vsel %vm1325, %v1347, %v1349
    %v1351 = vrot.slane %v1310, 1
    %v1352 = vsel %vm1325, %v1349, %v1351
    %v1366 = vmax.f32 %v1297, %v1328
    %v1367 = vmax.f32 %v1298, %v1330
    %v1368 = vmax.f32 %v1299, %v1332
    %v1369 = vmax.f32 %v1300, %v1334
    %v1370 = vmax.f32 %v1301, %v1336
    %v1371 = vmax.f32 %v1302, %v1338
    %v1372 = vmax.f32 %v1303, %v1340
    %v1373 = vmax.f32 %v1304, %v1342
    %v1374 = vmax.f32 %v1305, %v1344
    %v1375 = vmax.f32 %v1306, %v1346
    %v1376 = vmax.f32 %v1307, %v1348
    %v1377 = vmax.f32 %v1308, %v1350
    %v1378 = vmax.f32 %v1309, %v1352
    %v1379 = vlaneseq
    %v1380 = vshrl.u32 %v1379, 7
    %v1381 = vsub.s32 0, %v1380
    %v1382 = vrot.slane %v292, %v1381
    %v1383 = vadd.f32 %v1366, %v1382
    %v1384 = vadd.f32 %v1367, %v1382
    %v1385 = vadd.f32 %v1368, %v1382
    %v1386 = vadd.f32 %v1369, %v1382
    %v1387 = vadd.f32 %v1370, %v1382
    %v1388 = vadd.f32 %v1371, %v1382
    %v1389 = vadd.f32 %v1372, %v1382
    %v1390 = vadd.f32 %v1373, %v1382
    %v1391 = vadd.f32 %v1374, %v1382
    %v1392 = vadd.f32 %v1375, %v1382
    %v1393 = vadd.f32 %v1376, %v1382
    %v1394 = vadd.f32 %v1377, %v1382
    %v1395 = vadd.f32 %v1378, %v1382
    %v1396 = vmax.f32 %v1383, 0.0
    %v1397 = vmax.f32 %v1384, 0.0
    %v1398 = vmax.f32 %v1385, 0.0
    %v1399 = vmax.f32 %v1386, 0.0
    %v1400 = vmax.f32 %v1387, 0.0
    %v1401 = vmax.f32 %v1388, 0.0
    %v1402 = vmax.f32 %v1389, 0.0
    %v1403 = vmax.f32 %v1390, 0.0
    %v1404 = vmax.f32 %v1391, 0.0
    %v1405 = vmax.f32 %v1392, 0.0
    %v1406 = vmax.f32 %v1393, 0.0
    %v1407 = vmax.f32 %v1394, 0.0
    %v1408 = vmax.f32 %v1395, 0.0
    %v1409 = vpack.c.bf16 %v1397, %v1396
    %v1410 = vpack.c.bf16 %v1399, %v1398
    %v1411 = vpack.c.bf16 %v1401, %v1400
    %v1412 = vpack.c.bf16 %v1403, %v1402
    %v1413 = vpack.c.bf16 %v1405, %v1404
    %v1414 = vpack.c.bf16 %v1407, %v1406
    %v1415 = vpack.c.bf16 %v1408, %v1408
    %v1423 = vrot.slane %v1409, 1
    %v1424 = vrot.slane %v1410, 1
    %v1425 = vsel %vm421, %v1423, %v1424
    %v1426 = vrot.slane %v1411, 1
    %v1427 = vsel %vm421, %v1424, %v1426
    %v1428 = vrot.slane %v1412, 1
    %v1429 = vsel %vm421, %v1426, %v1428
    %v1430 = vrot.slane %v1413, 1
    %v1431 = vsel %vm421, %v1428, %v1430
    %v1432 = vrot.slane %v1414, 1
    %v1433 = vsel %vm421, %v1430, %v1432
    %v1434 = vrot.slane %v1415, 1
    %v1435 = vsel %vm421, %v1432, %v1434
    %v1442 = vrot.slane %v1409, 2
    %v1443 = vrot.slane %v1410, 2
    %v1444 = vsel %vm485, %v1442, %v1443
    %v1445 = vrot.slane %v1411, 2
    %v1446 = vsel %vm485, %v1443, %v1445
    %v1447 = vrot.slane %v1412, 2
    %v1448 = vsel %vm485, %v1445, %v1447
    %v1449 = vrot.slane %v1413, 2
    %v1450 = vsel %vm485, %v1447, %v1449
    %v1451 = vrot.slane %v1414, 2
    %v1452 = vsel %vm485, %v1449, %v1451
    %v1453 = vrot.slane %v1415, 2
    %v1454 = vsel %vm485, %v1451, %v1453
    %vm1461 = vcmask 1044480
    %v1462 = vrot.slane %v1409, 3
    %v1463 = vrot.slane %v1410, 3
    %v1464 = vsel %vm1461, %v1462, %v1463
    %v1465 = vrot.slane %v1411, 3
    %v1466 = vsel %vm1461, %v1463, %v1465
    %v1467 = vrot.slane %v1412, 3
    %v1468 = vsel %vm1461, %v1465, %v1467
    %v1469 = vrot.slane %v1413, 3
    %v1470 = vsel %vm1461, %v1467, %v1469
    %v1471 = vrot.slane %v1414, 3
    %v1472 = vsel %vm1461, %v1469, %v1471
    %v1473 = vrot.slane %v1415, 3
    %v1474 = vsel %vm1461, %v1471, %v1473
    %vm1481 = vcmask 1043456
    %v1482 = vrot.slane %v1409, 4
    %v1483 = vrot.slane %v1410, 4
    %v1484 = vsel %vm1481, %v1482, %v1483
    %v1485 = vrot.slane %v1411, 4
    %v1486 = vsel %vm1481, %v1483, %v1485
    %v1487 = vrot.slane %v1412, 4
    %v1488 = vsel %vm1481, %v1485, %v1487
    %v1489 = vrot.slane %v1413, 4
    %v1490 = vsel %vm1481, %v1487, %v1489
    %v1491 = vrot.slane %v1414, 4
    %v1492 = vsel %vm1481, %v1489, %v1491
    %v1493 = vrot.slane %v1415, 4
    %v1494 = vsel %vm1481, %v1491, %v1493
    %v1501 = vld [vmem:[#allocation7] sm:$0xff]
    %v1502 = vld [vmem:[#allocation7 + $0x8] sm:$0xff]
    %v1503 = vld [vmem:[#allocation7 + $0x10] sm:$0xff]
    %v1504 = vld [vmem:[#allocation7 + $0x18] sm:$0xff]
    %v1505 = vld [vmem:[#allocation7 + $0x20] sm:$0xff]
    %v1506 = vld [vmem:[#allocation7 + $0x28] sm:$0xff]
    %v1507 = vld [vmem:[#allocation7 + $0x30] sm:$0xff]
    %v1508 = vld [vmem:[#allocation7 + $0x38] sm:$0xff]
    %v1509 = vld [vmem:[#allocation7 + $0x40] sm:$0xff]
    %v1510 = vld [vmem:[#allocation7 + $0x48] sm:$0xff]
    %v1511 = vld [vmem:[#allocation7 + $0x50] sm:$0xff]
    %v1512 = vld [vmem:[#allocation7 + $0x58] sm:$0xff]
    %v1513 = vld [vmem:[#allocation7 + $0x60] sm:$0xff]
    %v1514 = vld [vmem:[#allocation7 + $0x68] sm:$0xff]
    %v1515 = vld [vmem:[#allocation7 + $0x70] sm:$0xff]
    %v1516 = vld [vmem:[#allocation7 + $0x78] sm:$0xff]
    %v1517 = vld [vmem:[#allocation7 + $0x80] sm:$0xff]
    %v1518 = vld [vmem:[#allocation7 + $0x88] sm:$0xff]
    %v1519 = vld [vmem:[#allocation7 + $0x90] sm:$0xff]
    %v1520 = vld [vmem:[#allocation7 + $0x98] sm:$0xff]
    %v1521 = vld [vmem:[#allocation7 + $0xa0] sm:$0xff]
    %v1522 = vld [vmem:[#allocation7 + $0xa8] sm:$0xff]
    %v1523 = vld [vmem:[#allocation7 + $0xb0] sm:$0xff]
    %v1524 = vld [vmem:[#allocation7 + $0xb8] sm:$0xff]
    %v1525 = vld [vmem:[#allocation7 + $0xc0] sm:$0xff]
    %v1526 = vld [vmem:[#allocation7 + $0xc8] sm:$0xff]
    %v1527 = vld [vmem:[#allocation7 + $0xd0] sm:$0xff]
    %v1528 = vld [vmem:[#allocation7 + $0xd8] sm:$0xff]
    %v1529 = vld [vmem:[#allocation7 + $0xe0] sm:$0xff]
    %v1530 = vld [vmem:[#allocation7 + $0xe8] sm:$0xff]
    %v1531 = vld [vmem:[#allocation7 + $0xf0] sm:$0xff]
    %v1532 = vld [vmem:[#allocation7 + $0xf8] sm:$0xff]
    %v1533 = vld [vmem:[#allocation7 + $0x100] sm:$0xff]
    %v1534 = vld [vmem:[#allocation7 + $0x108] sm:$0xff]
    %v1535 = vld [vmem:[#allocation7 + $0x110] sm:$0xff]
    %v1536 = vld [vmem:[#allocation7 + $0x118] sm:$0xff]
    %v1537 = vld [vmem:[#allocation7 + $0x120] sm:$0xff]
    %v1538 = vld [vmem:[#allocation7 + $0x128] sm:$0xff]
    %v1539 = vld [vmem:[#allocation7 + $0x130] sm:$0xff]
    %v1540 = vld [vmem:[#allocation7 + $0x138] sm:$0xff]
    %v1541 = vld [vmem:[#allocation7 + $0x140] sm:$0xff]
    %v1542 = vld [vmem:[#allocation7 + $0x148] sm:$0xff]
    %v1543 = vld [vmem:[#allocation7 + $0x150] sm:$0xff]
    %v1544 = vld [vmem:[#allocation7 + $0x158] sm:$0xff]
    %v1545 = vld [vmem:[#allocation7 + $0x160] sm:$0xff]
    %v1546 = vld [vmem:[#allocation7 + $0x168] sm:$0xff]
    %v1547 = vld [vmem:[#allocation7 + $0x170] sm:$0xff]
    %v1548 = vld [vmem:[#allocation7 + $0x178] sm:$0xff]
    %v1549 = vld [vmem:[#allocation7 + $0x180] sm:$0xff]
    %v1550 = vld [vmem:[#allocation7 + $0x188] sm:$0xff]
    %v1551 = vld [vmem:[#allocation7 + $0x190] sm:$0xff]
    %v1552 = vld [vmem:[#allocation7 + $0x198] sm:$0xff]
    %v1553 = vld [vmem:[#allocation7 + $0x1a0] sm:$0xff]
    %v1554 = vld [vmem:[#allocation7 + $0x1a8] sm:$0xff]
    %v1555 = vld [vmem:[#allocation7 + $0x1b0] sm:$0xff]
    %v1556 = vld [vmem:[#allocation7 + $0x1b8] sm:$0xff]
    %v1557 = vld [vmem:[#allocation7 + $0x1c0] sm:$0xff]
    %v1558 = vld [vmem:[#allocation7 + $0x1c8] sm:$0xff]
    %v1559 = vld [vmem:[#allocation7 + $0x1d0] sm:$0xff]
    %v1560 = vld [vmem:[#allocation7 + $0x1d8] sm:$0xff]
    %v1561 = vld [vmem:[#allocation7 + $0x1e0] sm:$0xff]
    %v1562 = vld [vmem:[#allocation7 + $0x1e8] sm:$0xff]
    %v1563 = vld [vmem:[#allocation7 + $0x1f0] sm:$0xff]
    %v1564 = vld [vmem:[#allocation7 + $0x1f8] sm:$0xff]
    %v1565 = vld [vmem:[#allocation7 + $0x200] sm:$0xff]
    %v1566 = vld [vmem:[#allocation7 + $0x208] sm:$0xff]
    %v1567 = vld [vmem:[#allocation7 + $0x210] sm:$0xff]
    %v1568 = vld [vmem:[#allocation7 + $0x218] sm:$0xff]
    %v1569 = vld [vmem:[#allocation7 + $0x220] sm:$0xff]
    %v1570 = vld [vmem:[#allocation7 + $0x228] sm:$0xff]
    %v1571 = vld [vmem:[#allocation7 + $0x230] sm:$0xff]
    %v1572 = vld [vmem:[#allocation7 + $0x238] sm:$0xff]
    %v1573 = vld [vmem:[#allocation7 + $0x240] sm:$0xff]
    %v1574 = vld [vmem:[#allocation7 + $0x248] sm:$0xff]
    %v1575 = vld [vmem:[#allocation7 + $0x250] sm:$0xff]
    %v1576 = vld [vmem:[#allocation7 + $0x258] sm:$0xff]
    %v1577 = vld [vmem:[#allocation7 + $0x260] sm:$0xff]
    %v1578 = vld [vmem:[#allocation7 + $0x268] sm:$0xff]
    %v1579 = vld [vmem:[#allocation7 + $0x270] sm:$0xff]
    %v1580 = vld [vmem:[#allocation7 + $0x278] sm:$0xff]
    %v1661 = vunpack.c.l.b16 %v1501
    %v1662 = vunpack.c.h.b16 %v1501
    %v1663 = vunpack.c.l.b16 %v1502
    %v1664 = vunpack.c.h.b16 %v1502
    %v1665 = vunpack.c.l.b16 %v1503
    %v1666 = vunpack.c.h.b16 %v1503
    %v1667 = vunpack.c.l.b16 %v1504
    %v1668 = vunpack.c.h.b16 %v1504
    %v1669 = vunpack.c.l.b16 %v1505
    %v1670 = vunpack.c.h.b16 %v1505
    %v1671 = vunpack.c.l.b16 %v1506
    %v1672 = vunpack.c.h.b16 %v1506
    %v1673 = vunpack.c.l.b16 %v1507
    %v1674 = vunpack.c.h.b16 %v1507
    %v1675 = vunpack.c.l.b16 %v1508
    %v1676 = vunpack.c.h.b16 %v1508
    %v1677 = vunpack.c.l.b16 %v1509
    %v1678 = vunpack.c.h.b16 %v1509
    %v1679 = vunpack.c.l.b16 %v1510
    %v1680 = vunpack.c.h.b16 %v1510
    %v1681 = vunpack.c.l.b16 %v1511
    %v1682 = vunpack.c.h.b16 %v1511
    %v1683 = vunpack.c.l.b16 %v1512
    %v1684 = vunpack.c.h.b16 %v1512
    %v1685 = vunpack.c.l.b16 %v1513
    %v1686 = vunpack.c.h.b16 %v1513
    %v1687 = vunpack.c.l.b16 %v1514
    %v1688 = vunpack.c.h.b16 %v1514
    %v1689 = vunpack.c.l.b16 %v1515
    %v1690 = vunpack.c.h.b16 %v1515
    %v1691 = vunpack.c.l.b16 %v1516
    %v1692 = vunpack.c.h.b16 %v1516
    %v1693 = vunpack.c.l.b16 %v1517
    %v1694 = vunpack.c.h.b16 %v1517
    %v1695 = vunpack.c.l.b16 %v1518
    %v1696 = vunpack.c.h.b16 %v1518
    %v1697 = vunpack.c.l.b16 %v1519
    %v1698 = vunpack.c.h.b16 %v1519
    %v1699 = vunpack.c.l.b16 %v1520
    %v1700 = vunpack.c.h.b16 %v1520
    %v1701 = vunpack.c.l.b16 %v1521
    %v1702 = vunpack.c.h.b16 %v1521
    %v1703 = vunpack.c.l.b16 %v1522
    %v1704 = vunpack.c.h.b16 %v1522
    %v1705 = vunpack.c.l.b16 %v1523
    %v1706 = vunpack.c.h.b16 %v1523
    %v1707 = vunpack.c.l.b16 %v1524
    %v1708 = vunpack.c.h.b16 %v1524
    %v1709 = vunpack.c.l.b16 %v1525
    %v1710 = vunpack.c.h.b16 %v1525
    %v1711 = vunpack.c.l.b16 %v1526
    %v1712 = vunpack.c.h.b16 %v1526
    %v1713 = vunpack.c.l.b16 %v1527
    %v1714 = vunpack.c.h.b16 %v1527
    %v1715 = vunpack.c.l.b16 %v1528
    %v1716 = vunpack.c.h.b16 %v1528
    %v1717 = vunpack.c.l.b16 %v1529
    %v1718 = vunpack.c.h.b16 %v1529
    %v1719 = vunpack.c.l.b16 %v1530
    %v1720 = vunpack.c.h.b16 %v1530
    %v1721 = vunpack.c.l.b16 %v1531
    %v1722 = vunpack.c.h.b16 %v1531
    %v1723 = vunpack.c.l.b16 %v1532
    %v1724 = vunpack.c.h.b16 %v1532
    %v1725 = vunpack.c.l.b16 %v1533
    %v1726 = vunpack.c.h.b16 %v1533
    %v1727 = vunpack.c.l.b16 %v1534
    %v1728 = vunpack.c.h.b16 %v1534
    %v1729 = vunpack.c.l.b16 %v1535
    %v1730 = vunpack.c.h.b16 %v1535
    %v1731 = vunpack.c.l.b16 %v1536
    %v1732 = vunpack.c.h.b16 %v1536
    %v1733 = vunpack.c.l.b16 %v1537
    %v1734 = vunpack.c.h.b16 %v1537
    %v1735 = vunpack.c.l.b16 %v1538
    %v1736 = vunpack.c.h.b16 %v1538
    %v1737 = vunpack.c.l.b16 %v1539
    %v1738 = vunpack.c.h.b16 %v1539
    %v1739 = vunpack.c.l.b16 %v1540
    %v1740 = vunpack.c.h.b16 %v1540
    %v1741 = vunpack.c.l.b16 %v1541
    %v1742 = vunpack.c.h.b16 %v1541
    %v1743 = vunpack.c.l.b16 %v1542
    %v1744 = vunpack.c.h.b16 %v1542
    %v1745 = vunpack.c.l.b16 %v1543
    %v1746 = vunpack.c.h.b16 %v1543
    %v1747 = vunpack.c.l.b16 %v1544
    %v1748 = vunpack.c.h.b16 %v1544
    %v1749 = vunpack.c.l.b16 %v1545
    %v1750 = vunpack.c.h.b16 %v1545
    %v1751 = vunpack.c.l.b16 %v1546
    %v1752 = vunpack.c.h.b16 %v1546
    %v1753 = vunpack.c.l.b16 %v1547
    %v1754 = vunpack.c.h.b16 %v1547
    %v1755 = vunpack.c.l.b16 %v1548
    %v1756 = vunpack.c.h.b16 %v1548
    %v1757 = vunpack.c.l.b16 %v1549
    %v1758 = vunpack.c.h.b16 %v1549
    %v1759 = vunpack.c.l.b16 %v1550
    %v1760 = vunpack.c.h.b16 %v1550
    %v1761 = vunpack.c.l.b16 %v1551
    %v1762 = vunpack.c.h.b16 %v1551
    %v1763 = vunpack.c.l.b16 %v1552
    %v1764 = vunpack.c.h.b16 %v1552
    %v1765 = vunpack.c.l.b16 %v1553
    %v1766 = vunpack.c.h.b16 %v1553
    %v1767 = vunpack.c.l.b16 %v1554
    %v1768 = vunpack.c.h.b16 %v1554
    %v1769 = vunpack.c.l.b16 %v1555
    %v1770 = vunpack.c.h.b16 %v1555
    %v1771 = vunpack.c.l.b16 %v1556
    %v1772 = vunpack.c.h.b16 %v1556
    %v1773 = vunpack.c.l.b16 %v1557
    %v1774 = vunpack.c.h.b16 %v1557
    %v1775 = vunpack.c.l.b16 %v1558
    %v1776 = vunpack.c.h.b16 %v1558
    %v1777 = vunpack.c.l.b16 %v1559
    %v1778 = vunpack.c.h.b16 %v1559
    %v1779 = vunpack.c.l.b16 %v1560
    %v1780 = vunpack.c.h.b16 %v1560
    %v1781 = vunpack.c.l.b16 %v1561
    %v1782 = vunpack.c.h.b16 %v1561
    %v1783 = vunpack.c.l.b16 %v1562
    %v1784 = vunpack.c.h.b16 %v1562
    %v1785 = vunpack.c.l.b16 %v1563
    %v1786 = vunpack.c.h.b16 %v1563
    %v1787 = vunpack.c.l.b16 %v1564
    %v1788 = vunpack.c.h.b16 %v1564
    %v1789 = vunpack.c.l.b16 %v1565
    %v1790 = vunpack.c.h.b16 %v1565
    %v1791 = vunpack.c.l.b16 %v1566
    %v1792 = vunpack.c.h.b16 %v1566
    %v1793 = vunpack.c.l.b16 %v1567
    %v1794 = vunpack.c.h.b16 %v1567
    %v1795 = vunpack.c.l.b16 %v1568
    %v1796 = vunpack.c.h.b16 %v1568
    %v1797 = vunpack.c.l.b16 %v1569
    %v1798 = vunpack.c.h.b16 %v1569
    %v1799 = vunpack.c.l.b16 %v1570
    %v1800 = vunpack.c.h.b16 %v1570
    %v1801 = vunpack.c.l.b16 %v1571
    %v1802 = vunpack.c.h.b16 %v1571
    %v1803 = vunpack.c.l.b16 %v1572
    %v1804 = vunpack.c.h.b16 %v1572
    %v1805 = vunpack.c.l.b16 %v1573
    %v1806 = vunpack.c.h.b16 %v1573
    %v1807 = vunpack.c.l.b16 %v1574
    %v1808 = vunpack.c.h.b16 %v1574
    %v1809 = vunpack.c.l.b16 %v1575
    %v1810 = vunpack.c.h.b16 %v1575
    %v1811 = vunpack.c.l.b16 %v1576
    %v1812 = vunpack.c.h.b16 %v1576
    %v1813 = vunpack.c.l.b16 %v1577
    %v1814 = vunpack.c.h.b16 %v1577
    %v1815 = vunpack.c.l.b16 %v1578
    %v1816 = vunpack.c.h.b16 %v1578
    %v1817 = vunpack.c.l.b16 %v1579
    %v1818 = vunpack.c.h.b16 %v1579
    %v1819 = vunpack.c.l.b16 %v1580
    %v1820 = vunpack.c.h.b16 %v1580
    %v1821 = vpack.c.b16 %v1663, %v1661
    %v1822 = vpack.c.b16 %v1664, %v1662
    %v1823 = vpack.c.b16 %v1667, %v1665
    %v1824 = vpack.c.b16 %v1668, %v1666
    %v1825 = vpack.c.b16 %v1671, %v1669
    %v1826 = vpack.c.b16 %v1672, %v1670
    %v1827 = vpack.c.b16 %v1675, %v1673
    %v1828 = vpack.c.b16 %v1676, %v1674
    %v1829 = vpack.c.b16 %v1679, %v1677
    %v1830 = vpack.c.b16 %v1680, %v1678
    %v1831 = vpack.c.b16 %v1683, %v1681
    %v1832 = vpack.c.b16 %v1684, %v1682
    %v1833 = vpack.c.b16 %v1687, %v1685
    %v1834 = vpack.c.b16 %v1688, %v1686
    %v1835 = vpack.c.b16 %v1691, %v1689
    %v1836 = vpack.c.b16 %v1692, %v1690
    %v1837 = vpack.c.b16 %v1695, %v1693
    %v1838 = vpack.c.b16 %v1696, %v1694
    %v1839 = vpack.c.b16 %v1699, %v1697
    %v1840 = vpack.c.b16 %v1700, %v1698
    %v1841 = vpack.c.b16 %v1703, %v1701
    %v1842 = vpack.c.b16 %v1704, %v1702
    %v1843 = vpack.c.b16 %v1707, %v1705
    %v1844 = vpack.c.b16 %v1708, %v1706
    %v1845 = vpack.c.b16 %v1711, %v1709
    %v1846 = vpack.c.b16 %v1712, %v1710
    %v1847 = vpack.c.b16 %v1715, %v1713
    %v1848 = vpack.c.b16 %v1716, %v1714
    %v1849 = vpack.c.b16 %v1719, %v1717
    %v1850 = vpack.c.b16 %v1720, %v1718
    %v1851 = vpack.c.b16 %v1723, %v1721
    %v1852 = vpack.c.b16 %v1724, %v1722
    %v1853 = vpack.c.b16 %v1727, %v1725
    %v1854 = vpack.c.b16 %v1728, %v1726
    %v1855 = vpack.c.b16 %v1731, %v1729
    %v1856 = vpack.c.b16 %v1732, %v1730
    %v1857 = vpack.c.b16 %v1735, %v1733
    %v1858 = vpack.c.b16 %v1736, %v1734
    %v1859 = vpack.c.b16 %v1739, %v1737
    %v1860 = vpack.c.b16 %v1740, %v1738
    %v1861 = vpack.c.b16 %v1743, %v1741
    %v1862 = vpack.c.b16 %v1744, %v1742
    %v1863 = vpack.c.b16 %v1747, %v1745
    %v1864 = vpack.c.b16 %v1748, %v1746
    %v1865 = vpack.c.b16 %v1751, %v1749
    %v1866 = vpack.c.b16 %v1752, %v1750
    %v1867 = vpack.c.b16 %v1755, %v1753
    %v1868 = vpack.c.b16 %v1756, %v1754
    %v1869 = vpack.c.b16 %v1759, %v1757
    %v1870 = vpack.c.b16 %v1760, %v1758
    %v1871 = vpack.c.b16 %v1763, %v1761
    %v1872 = vpack.c.b16 %v1764, %v1762
    %v1873 = vpack.c.b16 %v1767, %v1765
    %v1874 = vpack.c.b16 %v1768, %v1766
    %v1875 = vpack.c.b16 %v1771, %v1769
    %v1876 = vpack.c.b16 %v1772, %v1770
    %v1877 = vpack.c.b16 %v1775, %v1773
    %v1878 = vpack.c.b16 %v1776, %v1774
    %v1879 = vpack.c.b16 %v1779, %v1777
    %v1880 = vpack.c.b16 %v1780, %v1778
    %v1881 = vpack.c.b16 %v1783, %v1781
    %v1882 = vpack.c.b16 %v1784, %v1782
    %v1883 = vpack.c.b16 %v1787, %v1785
    %v1884 = vpack.c.b16 %v1788, %v1786
    %v1885 = vpack.c.b16 %v1791, %v1789
    %v1886 = vpack.c.b16 %v1792, %v1790
    %v1887 = vpack.c.b16 %v1795, %v1793
    %v1888 = vpack.c.b16 %v1796, %v1794
    %v1889 = vpack.c.b16 %v1799, %v1797
    %v1890 = vpack.c.b16 %v1800, %v1798
    %v1891 = vpack.c.b16 %v1803, %v1801
    %v1892 = vpack.c.b16 %v1804, %v1802
    %v1893 = vpack.c.b16 %v1807, %v1805
    %v1894 = vpack.c.b16 %v1808, %v1806
    %v1895 = vpack.c.b16 %v1811, %v1809
    %v1896 = vpack.c.b16 %v1812, %v1810
    %v1897 = vpack.c.b16 %v1815, %v1813
    %v1898 = vpack.c.b16 %v1816, %v1814
    %v1899 = vpack.c.b16 %v1819, %v1817
    %v1900 = vpack.c.b16 %v1820, %v1818
    %1981 = vmatprep.subr.bf16.mxu0 %v1822
    %1982 = vmatpush1.bf16.msra.mxu0 %v1821
    %1983 = vmatprep.subr.bf16.mxu0 %v1824
    %1984 = vmatpush1.bf16.msra.mxu0 %v1823
    %1985 = vmatprep.subr.bf16.mxu0 %v1826
    %1986 = vmatpush1.bf16.msra.mxu0 %v1825
    %1987 = vmatprep.subr.bf16.mxu0 %v1828
    %1988 = vmatpush1.bf16.msra.mxu0 %v1827
    %1989 = vmatprep.subr.bf16.mxu0 %v1830
    %1990 = vmatpush1.bf16.msra.mxu0 %v1829
    %1991 = vmatprep.subr.bf16.mxu0 %v1832
    %1992 = vmatpush1.bf16.msra.mxu0 %v1831
    %1993 = vmatprep.subr.bf16.mxu0 %v1834
    %1994 = vmatpush1.bf16.msra.mxu0 %v1833
    %1995 = vmatprep.subr.bf16.mxu0 %v1836
    %1996 = vmatpush1.bf16.msra.mxu0 %v1835
    %1997 = vmatprep.subr.bf16.mxu0 %v1838
    %1998 = vmatpush1.bf16.msra.mxu0 %v1837
    %1999 = vmatprep.subr.bf16.mxu0 %v1840
    %2000 = vmatpush1.bf16.msra.mxu0 %v1839
    %2001 = vmatprep.subr.bf16.mxu0 %v1842
    %2002 = vmatpush1.bf16.msra.mxu0 %v1841
    %2003 = vmatprep.subr.bf16.mxu0 %v1844
    %2004 = vmatpush1.bf16.msra.mxu0 %v1843
    %2005 = vmatprep.subr.bf16.mxu0 %v1846
    %2006 = vmatpush1.bf16.msra.mxu0 %v1845
    %2007 = vmatprep.subr.bf16.mxu0 %v1848
    %2008 = vmatpush1.bf16.msra.mxu0 %v1847
    %2009 = vmatprep.subr.bf16.mxu0 %v1850
    %2010 = vmatpush1.bf16.msra.mxu0 %v1849
    %2011 = vmatprep.subr.bf16.mxu0 %v1852
    %2012 = vmatpush1.bf16.msra.mxu0 %v1851
    %2013 = vmatprep.mubr.bf16.mxu0 %v1425
    %2014 = vmatmul.mubr.bf16.gmra.mrb[0].mxu0 %v1409
    %v2015 = vpop.f32.mrb[0].mxu0
    %v2016 = vadd.f32 0.0, %v2015
    %v2017 = vpop.f32.mrb[0].mxu0
    %v2018 = vadd.f32 0.0, %v2017
    %v2019 = vpop.f32.mrb[0].mxu0
    %v2020 = vadd.f32 0.0, %v2019
    %v2021 = vpop.f32.mrb[0].mxu0
    %v2022 = vadd.f32 0.0, %v2021
    %2023 = vmatprep.mubr.bf16.mxu0 %v1427
    %2024 = vmatmul.mubr.bf16.gmra.mrb[0].mxu0 %v1410
    %v2025 = vpop.f32.mrb[0].mxu0
    %v2026 = vadd.f32 0.0, %v2025
    %v2027 = vpop.f32.mrb[0].mxu0
    %v2028 = vadd.f32 0.0, %v2027
    %v2029 = vpop.f32.mrb[0].mxu0
    %v2030 = vadd.f32 0.0, %v2029
    %v2031 = vpop.f32.mrb[0].mxu0
    %v2032 = vadd.f32 0.0, %v2031
    %2033 = vmatprep.mubr.bf16.mxu0 %v1429
    %2034 = vmatmul.mubr.bf16.gmra.mrb[0].mxu0 %v1411
    %v2035 = vpop.f32.mrb[0].mxu0
    %v2036 = vadd.f32 0.0, %v2035
    %v2037 = vpop.f32.mrb[0].mxu0
    %v2038 = vadd.f32 0.0, %v2037
    %v2039 = vpop.f32.mrb[0].mxu0
    %v2040 = vadd.f32 0.0, %v2039
    %v2041 = vpop.f32.mrb[0].mxu0
    %v2042 = vadd.f32 0.0, %v2041
    %2043 = vmatprep.mubr.bf16.mxu0 %v1431
    %2044 = vmatmul.mubr.bf16.gmra.mrb[0].mxu0 %v1412
    %v2045 = vpop.f32.mrb[0].mxu0
    %v2046 = vadd.f32 0.0, %v2045
    %v2047 = vpop.f32.mrb[0].mxu0
    %v2048 = vadd.f32 0.0, %v2047
    %v2049 = vpop.f32.mrb[0].mxu0
    %v2050 = vadd.f32 0.0, %v2049
    %v2051 = vpop.f32.mrb[0].mxu0
    %v2052 = vadd.f32 0.0, %v2051
    %2053 = vmatprep.mubr.bf16.mxu0 %v1433
    %2054 = vmatmul.mubr.bf16.gmra.mrb[0].mxu0 %v1413
    %v2055 = vpop.f32.mrb[0].mxu0
    %v2056 = vadd.f32 0.0, %v2055
    %v2057 = vpop.f32.mrb[0].mxu0
    %v2058 = vadd.f32 0.0, %v2057
    %v2059 = vpop.f32.mrb[0].mxu0
    %v2060 = vadd.f32 0.0, %v2059
    %v2061 = vpop.f32.mrb[0].mxu0
    %v2062 = vadd.f32 0.0, %v2061
    %2063 = vmatprep.mubr.bf16.mxu0 %v1435
    %2064 = vmatmul.mubr.bf16.gmra.mrb[0].mxu0 %v1414
    %v2065 = vpop.f32.mrb[0].mxu0
    %v2066 = vadd.f32 0.0, %v2065
    %v2067 = vpop.f32.mrb[0].mxu0
    %v2068 = vadd.f32 0.0, %v2067
    %v2069 = vpop.f32.mrb[0].mxu0
    %v2070 = vpop.f32.mrb[0].mxu0
    %2071 = vdwg.mxu0
    %2072 = vmatprep.subr.bf16.mxu0 %v1854
    %2073 = vmatpush1.bf16.msra.mxu0 %v1853
    %2074 = vmatprep.subr.bf16.mxu0 %v1856
    %2075 = vmatpush1.bf16.msra.mxu0 %v1855
    %2076 = vmatprep.subr.bf16.mxu0 %v1858
    %2077 = vmatpush1.bf16.msra.mxu0 %v1857
    %2078 = vmatprep.subr.bf16.mxu0 %v1860
    %2079 = vmatpush1.bf16.msra.mxu0 %v1859
    %2080 = vmatprep.subr.bf16.mxu0 %v1862
    %2081 = vmatpush1.bf16.msra.mxu0 %v1861
    %2082 = vmatprep.subr.bf16.mxu0 %v1864
    %2083 = vmatpush1.bf16.msra.mxu0 %v1863
    %2084 = vmatprep.subr.bf16.mxu0 %v1866
    %2085 = vmatpush1.bf16.msra.mxu0 %v1865
    %2086 = vmatprep.subr.bf16.mxu0 %v1868
    %2087 = vmatpush1.bf16.msra.mxu0 %v1867
    %2088 = vmatprep.subr.bf16.mxu0 %v1870
    %2089 = vmatpush1.bf16.msra.mxu0 %v1869
    %2090 = vmatprep.subr.bf16.mxu0 %v1872
    %2091 = vmatpush1.bf16.msra.mxu0 %v1871
    %2092 = vmatprep.subr.bf16.mxu0 %v1874
    %2093 = vmatpush1.bf16.msra.mxu0 %v1873
    %2094 = vmatprep.subr.bf16.mxu0 %v1876
    %2095 = vmatpush1.bf16.msra.mxu0 %v1875
    %2096 = vmatprep.subr.bf16.mxu0 %v1878
    %2097 = vmatpush1.bf16.msra.mxu0 %v1877
    %2098 = vmatprep.subr.bf16.mxu0 %v1880
    %2099 = vmatpush1.bf16.msra.mxu0 %v1879
    %2100 = vmatprep.subr.bf16.mxu0 %v1882
    %2101 = vmatpush1.bf16.msra.mxu0 %v1881
    %2102 = vmatprep.subr.bf16.mxu0 %v1884
    %2103 = vmatpush1.bf16.msra.mxu0 %v1883
    %2104 = vmatprep.mubr.bf16.mxu0 %v1464
    %2105 = vmatmul.mubr.bf16.gmra.mrb[0].mxu0 %v1444
    %v2106 = vpop.f32.mrb[0].mxu0
    %v2107 = vadd.f32 %v2016, %v2106
    %v2108 = vpop.f32.mrb[0].mxu0
    %v2109 = vadd.f32 %v2018, %v2108
    %v2110 = vpop.f32.mrb[0].mxu0
    %v2111 = vadd.f32 %v2020, %v2110
    %v2112 = vpop.f32.mrb[0].mxu0
    %v2113 = vadd.f32 %v2022, %v2112
    %2114 = vmatprep.mubr.bf16.mxu0 %v1466
    %2115 = vmatmul.mubr.bf16.gmra.mrb[0].mxu0 %v1446
    %v2116 = vpop.f32.mrb[0].mxu0
    %v2117 = vadd.f32 %v2026, %v2116
    %v2118 = vpop.f32.mrb[0].mxu0
    %v2119 = vadd.f32 %v2028, %v2118
    %v2120 = vpop.f32.mrb[0].mxu0
    %v2121 = vadd.f32 %v2030, %v2120
    %v2122 = vpop.f32.mrb[0].mxu0
    %v2123 = vadd.f32 %v2032, %v2122
    %2124 = vmatprep.mubr.bf16.mxu0 %v1468
    %2125 = vmatmul.mubr.bf16.gmra.mrb[0].mxu0 %v1448
    %v2126 = vpop.f32.mrb[0].mxu0
    %v2127 = vadd.f32 %v2036, %v2126
    %v2128 = vpop.f32.mrb[0].mxu0
    %v2129 = vadd.f32 %v2038, %v2128
    %v2130 = vpop.f32.mrb[0].mxu0
    %v2131 = vadd.f32 %v2040, %v2130
    %v2132 = vpop.f32.mrb[0].mxu0
    %v2133 = vadd.f32 %v2042, %v2132
    %2134 = vmatprep.mubr.bf16.mxu0 %v1470
    %2135 = vmatmul.mubr.bf16.gmra.mrb[0].mxu0 %v1450
    %v2136 = vpop.f32.mrb[0].mxu0
    %v2137 = vadd.f32 %v2046, %v2136
    %v2138 = vpop.f32.mrb[0].mxu0
    %v2139 = vadd.f32 %v2048, %v2138
    %v2140 = vpop.f32.mrb[0].mxu0
    %v2141 = vadd.f32 %v2050, %v2140
    %v2142 = vpop.f32.mrb[0].mxu0
    %v2143 = vadd.f32 %v2052, %v2142
    %2144 = vmatprep.mubr.bf16.mxu0 %v1472
    %2145 = vmatmul.mubr.bf16.gmra.mrb[0].mxu0 %v1452
    %v2146 = vpop.f32.mrb[0].mxu0
    %v2147 = vadd.f32 %v2056, %v2146
    %v2148 = vpop.f32.mrb[0].mxu0
    %v2149 = vadd.f32 %v2058, %v2148
    %v2150 = vpop.f32.mrb[0].mxu0
    %v2151 = vadd.f32 %v2060, %v2150
    %v2152 = vpop.f32.mrb[0].mxu0
    %v2153 = vadd.f32 %v2062, %v2152
    %2154 = vmatprep.mubr.bf16.mxu0 %v1474
    %2155 = vmatmul.mubr.bf16.gmra.mrb[0].mxu0 %v1454
    %v2156 = vpop.f32.mrb[0].mxu0
    %v2157 = vadd.f32 %v2066, %v2156
    %v2158 = vpop.f32.mrb[0].mxu0
    %v2159 = vadd.f32 %v2068, %v2158
    %v2160 = vpop.f32.mrb[0].mxu0
    %v2161 = vpop.f32.mrb[0].mxu0
    %2162 = vdwg.mxu0
    %2163 = vmatprep.subr.bf16.mxu0 %v1886
    %2164 = vmatpush1.bf16.msra.mxu0 %v1885
    %2165 = vmatprep.subr.bf16.mxu0 %v1888
    %2166 = vmatpush1.bf16.msra.mxu0 %v1887
    %2167 = vmatprep.subr.bf16.mxu0 %v1890
    %2168 = vmatpush1.bf16.msra.mxu0 %v1889
    %2169 = vmatprep.subr.bf16.mxu0 %v1892
    %2170 = vmatpush1.bf16.msra.mxu0 %v1891
    %2171 = vmatprep.subr.bf16.mxu0 %v1894
    %2172 = vmatpush1.bf16.msra.mxu0 %v1893
    %2173 = vmatprep.subr.bf16.mxu0 %v1896
    %2174 = vmatpush1.bf16.msra.mxu0 %v1895
    %2175 = vmatprep.subr.bf16.mxu0 %v1898
    %2176 = vmatpush1.bf16.msra.mxu0 %v1897
    %2177 = vmatprep.subr.bf16.mxu0 %v1900
    %2178 = vmatpush1.bf16.msra.mxu0 %v1899
    %2179 = vmatprep.subr.bf16.mxu0 0
    %2180 = vmatpush1.bf16.msra.mxu0 0
    %2181 = vmatprep.subr.bf16.mxu0 0
    %2182 = vmatpush1.bf16.msra.mxu0 0
    %2183 = vmatprep.subr.bf16.mxu0 0
    %2184 = vmatpush1.bf16.msra.mxu0 0
    %2185 = vmatprep.subr.bf16.mxu0 0
    %2186 = vmatpush1.bf16.msra.mxu0 0
    %2187 = vmatprep.subr.bf16.mxu0 0
    %2188 = vmatpush1.bf16.msra.mxu0 0
    %2189 = vmatprep.subr.bf16.mxu0 0
    %2190 = vmatpush1.bf16.msra.mxu0 0
    %2191 = vmatprep.subr.bf16.mxu0 0
    %2192 = vmatpush1.bf16.msra.mxu0 0
    %2193 = vmatprep.subr.bf16.mxu0 0
    %2194 = vmatpush1.bf16.msra.mxu0 0
    %2195 = vmatprep.mubr.bf16.mxu0 0
    %2196 = vmatmul.mubr.bf16.gmra.mrb[0].mxu0 %v1484
    %v2197 = vpop.f32.mrb[0].mxu0
    %v2198 = vadd.f32 %v2107, %v2197
    %v2199 = vpop.f32.mrb[0].mxu0
    %v2200 = vadd.f32 %v2109, %v2199
    %v2201 = vpop.f32.mrb[0].mxu0
    %v2202 = vadd.f32 %v2111, %v2201
    %v2203 = vpop.f32.mrb[0].mxu0
    %v2204 = vadd.f32 %v2113, %v2203
    %2205 = vmatprep.mubr.bf16.mxu0 0
    %2206 = vmatmul.mubr.bf16.gmra.mrb[0].mxu0 %v1486
    %v2207 = vpop.f32.mrb[0].mxu0
    %v2208 = vadd.f32 %v2117, %v2207
    %v2209 = vpop.f32.mrb[0].mxu0
    %v2210 = vadd.f32 %v2119, %v2209
    %v2211 = vpop.f32.mrb[0].mxu0
    %v2212 = vadd.f32 %v2121, %v2211
    %v2213 = vpop.f32.mrb[0].mxu0
    %v2214 = vadd.f32 %v2123, %v2213
    %2215 = vmatprep.mubr.bf16.mxu0 0
    %2216 = vmatmul.mubr.bf16.gmra.mrb[0].mxu0 %v1488
    %v2217 = vpop.f32.mrb[0].mxu0
    %v2218 = vadd.f32 %v2127, %v2217
    %v2219 = vpop.f32.mrb[0].mxu0
    %v2220 = vadd.f32 %v2129, %v2219
    %v2221 = vpop.f32.mrb[0].mxu0
    %v2222 = vadd.f32 %v2131, %v2221
    %v2223 = vpop.f32.mrb[0].mxu0
    %v2224 = vadd.f32 %v2133, %v2223
    %2225 = vmatprep.mubr.bf16.mxu0 0
    %2226 = vmatmul.mubr.bf16.gmra.mrb[0].mxu0 %v1490
    %v2227 = vpop.f32.mrb[0].mxu0
    %v2228 = vadd.f32 %v2137, %v2227
    %v2229 = vpop.f32.mrb[0].mxu0
    %v2230 = vadd.f32 %v2139, %v2229
    %v2231 = vpop.f32.mrb[0].mxu0
    %v2232 = vadd.f32 %v2141, %v2231
    %v2233 = vpop.f32.mrb[0].mxu0
    %v2234 = vadd.f32 %v2143, %v2233
    %2235 = vmatprep.mubr.bf16.mxu0 0
    %2236 = vmatmul.mubr.bf16.gmra.mrb[0].mxu0 %v1492
    %v2237 = vpop.f32.mrb[0].mxu0
    %v2238 = vadd.f32 %v2147, %v2237
    %v2239 = vpop.f32.mrb[0].mxu0
    %v2240 = vadd.f32 %v2149, %v2239
    %v2241 = vpop.f32.mrb[0].mxu0
    %v2242 = vadd.f32 %v2151, %v2241
    %v2243 = vpop.f32.mrb[0].mxu0
    %v2244 = vadd.f32 %v2153, %v2243
    %2245 = vmatprep.mubr.bf16.mxu0 0
    %2246 = vmatmul.mubr.bf16.gmra.mrb[0].mxu0 %v1494
    %v2247 = vpop.f32.mrb[0].mxu0
    %v2248 = vadd.f32 %v2157, %v2247
    %v2249 = vpop.f32.mrb[0].mxu0
    %v2250 = vadd.f32 %v2159, %v2249
    %v2251 = vpop.f32.mrb[0].mxu0
    %v2252 = vpop.f32.mrb[0].mxu0
    %2253 = vdwg.mxu0
    %v2254 = vmax.f32 %v2198, %v2200
    %v2255 = vmax.f32 %v2202, %v2204
    %v2256 = vmax.f32 %v2208, %v2210
    %v2257 = vmax.f32 %v2212, %v2214
    %v2258 = vmax.f32 %v2218, %v2220
    %v2259 = vmax.f32 %v2222, %v2224
    %v2260 = vmax.f32 %v2228, %v2230
    %v2261 = vmax.f32 %v2232, %v2234
    %v2262 = vmax.f32 %v2238, %v2240
    %v2263 = vmax.f32 %v2242, %v2244
    %v2264 = vmax.f32 %v2248, %v2250
    %vm2276 = vcmask 1045504
    %v2277 = vrot.slane %v2254, 2
    %v2278 = vrot.slane %v2255, 2
    %v2279 = vsel %vm2276, %v2277, %v2278
    %v2280 = vrot.slane %v2256, 2
    %v2281 = vsel %vm2276, %v2278, %v2280
    %v2282 = vrot.slane %v2257, 2
    %v2283 = vsel %vm2276, %v2280, %v2282
    %v2284 = vrot.slane %v2258, 2
    %v2285 = vsel %vm2276, %v2282, %v2284
    %v2286 = vrot.slane %v2259, 2
    %v2287 = vsel %vm2276, %v2284, %v2286
    %v2288 = vrot.slane %v2260, 2
    %v2289 = vsel %vm2276, %v2286, %v2288
    %v2290 = vrot.slane %v2261, 2
    %v2291 = vsel %vm2276, %v2288, %v2290
    %v2292 = vrot.slane %v2262, 2
    %v2293 = vsel %vm2276, %v2290, %v2292
    %v2294 = vrot.slane %v2263, 2
    %v2295 = vsel %vm2276, %v2292, %v2294
    %v2296 = vrot.slane %v2264, 2
    %v2297 = vsel %vm2276, %v2294, %v2296
    %v2308 = vmax.f32 %v2254, %v2279
    %v2309 = vmax.f32 %v2255, %v2281
    %v2310 = vmax.f32 %v2256, %v2283
    %v2311 = vmax.f32 %v2257, %v2285
    %v2312 = vmax.f32 %v2258, %v2287
    %v2313 = vmax.f32 %v2259, %v2289
    %v2314 = vmax.f32 %v2260, %v2291
    %v2315 = vmax.f32 %v2261, %v2293
    %v2316 = vmax.f32 %v2262, %v2295
    %v2317 = vmax.f32 %v2263, %v2297
    %v2318 = vlaneseq
    %v2319 = vshrl.u32 %v2318, 7
    %v2320 = vsub.s32 1, %v2319
    %v2321 = vrot.slane %v292, %v2320
    %v2322 = vadd.f32 %v2308, %v2321
    %v2323 = vadd.f32 %v2309, %v2321
    %v2324 = vadd.f32 %v2310, %v2321
    %v2325 = vadd.f32 %v2311, %v2321
    %v2326 = vadd.f32 %v2312, %v2321
    %v2327 = vadd.f32 %v2313, %v2321
    %v2328 = vadd.f32 %v2314, %v2321
    %v2329 = vadd.f32 %v2315, %v2321
    %v2330 = vadd.f32 %v2316, %v2321
    %v2331 = vadd.f32 %v2317, %v2321
    %v2332 = vmax.f32 %v2322, 0.0
    %v2333 = vmax.f32 %v2323, 0.0
    %v2334 = vmax.f32 %v2324, 0.0
    %v2335 = vmax.f32 %v2325, 0.0
    %v2336 = vmax.f32 %v2326, 0.0
    %v2337 = vmax.f32 %v2327, 0.0
    %v2338 = vmax.f32 %v2328, 0.0
    %v2339 = vmax.f32 %v2329, 0.0
    %v2340 = vmax.f32 %v2330, 0.0
    %v2341 = vmax.f32 %v2331, 0.0
    %v2342 = vpack.c.bf16 %v2333, %v2332
    %v2343 = vpack.c.bf16 %v2335, %v2334
    %v2344 = vpack.c.bf16 %v2337, %v2336
    %v2345 = vpack.c.bf16 %v2339, %v2338
    %v2346 = vpack.c.bf16 %v2341, %v2340
    %v2352 = vrot.slane %v2342, 2
    %v2353 = vrot.slane %v2343, 2
    %v2354 = vsel %vm485, %v2352, %v2353
    %v2355 = vrot.slane %v2344, 2
    %v2356 = vsel %vm485, %v2353, %v2355
    %v2357 = vrot.slane %v2345, 2
    %v2358 = vsel %vm485, %v2355, %v2357
    %v2359 = vrot.slane %v2346, 2
    %v2360 = vsel %vm485, %v2357, %v2359
    %v2365 = vrot.slane %v2342, 4
    %v2366 = vrot.slane %v2343, 4
    %v2367 = vsel %vm1481, %v2365, %v2366
    %v2368 = vrot.slane %v2344, 4
    %v2369 = vsel %vm1481, %v2366, %v2368
    %v2370 = vrot.slane %v2345, 4
    %v2371 = vsel %vm1481, %v2368, %v2370
    %v2372 = vrot.slane %v2346, 4
    %v2373 = vsel %vm1481, %v2370, %v2372
    %vm2378 = vcmask 1041408
    %v2379 = vrot.slane %v2342, 6
    %v2380 = vrot.slane %v2343, 6
    %v2381 = vsel %vm2378, %v2379, %v2380
    %v2382 = vrot.slane %v2344, 6
    %v2383 = vsel %vm2378, %v2380, %v2382
    %v2384 = vrot.slane %v2345, 6
    %v2385 = vsel %vm2378, %v2382, %v2384
    %v2386 = vrot.slane %v2346, 6
    %v2387 = vsel %vm2378, %v2384, %v2386
    %v2392 = vld [vmem:[#allocation9] sm:$0xf]
    %v2393 = vld [vmem:[#allocation9 + $0x4] sm:$0xf]
    %v2394 = vld [vmem:[#allocation9 + $0x8] sm:$0xf]
    %v2395 = vld [vmem:[#allocation9 + $0xc] sm:$0xf]
    %v2396 = vld [vmem:[#allocation9 + $0x10] sm:$0xf]
    %v2397 = vld [vmem:[#allocation9 + $0x14] sm:$0xf]
    %v2398 = vld [vmem:[#allocation9 + $0x18] sm:$0xf]
    %v2399 = vld [vmem:[#allocation9 + $0x1c] sm:$0xf]
    %v2400 = vld [vmem:[#allocation9 + $0x20] sm:$0xf]
    %v2401 = vld [vmem:[#allocation9 + $0x24] sm:$0xf]
    %v2402 = vld [vmem:[#allocation9 + $0x28] sm:$0xf]
    %v2403 = vld [vmem:[#allocation9 + $0x2c] sm:$0xf]
    %v2404 = vld [vmem:[#allocation9 + $0x30] sm:$0xf]
    %v2405 = vld [vmem:[#allocation9 + $0x34] sm:$0xf]
    %v2406 = vld [vmem:[#allocation9 + $0x38] sm:$0xf]
    %v2407 = vld [vmem:[#allocation9 + $0x3c] sm:$0xf]
    %v2408 = vld [vmem:[#allocation9 + $0x40] sm:$0xf]
    %v2409 = vld [vmem:[#allocation9 + $0x44] sm:$0xf]
    %v2410 = vld [vmem:[#allocation9 + $0x48] sm:$0xf]
    %v2411 = vld [vmem:[#allocation9 + $0x4c] sm:$0xf]
    %v2412 = vld [vmem:[#allocation9 + $0x50] sm:$0xf]
    %v2413 = vld [vmem:[#allocation9 + $0x54] sm:$0xf]
    %v2414 = vld [vmem:[#allocation9 + $0x58] sm:$0xf]
    %v2415 = vld [vmem:[#allocation9 + $0x5c] sm:$0xf]
    %v2416 = vld [vmem:[#allocation9 + $0x60] sm:$0xf]
    %v2417 = vld [vmem:[#allocation9 + $0x64] sm:$0xf]
    %v2418 = vld [vmem:[#allocation9 + $0x68] sm:$0xf]
    %v2419 = vld [vmem:[#allocation9 + $0x6c] sm:$0xf]
    %v2420 = vld [vmem:[#allocation9 + $0x70] sm:$0xf]
    %v2421 = vld [vmem:[#allocation9 + $0x74] sm:$0xf]
    %v2422 = vld [vmem:[#allocation9 + $0x78] sm:$0xf]
    %v2423 = vld [vmem:[#allocation9 + $0x7c] sm:$0xf]
    %v2424 = vld [vmem:[#allocation9 + $0x80] sm:$0xf]
    %v2425 = vld [vmem:[#allocation9 + $0x84] sm:$0xf]
    %v2426 = vld [vmem:[#allocation9 + $0x88] sm:$0xf]
    %v2427 = vld [vmem:[#allocation9 + $0x8c] sm:$0xf]
    %v2428 = vld [vmem:[#allocation9 + $0x90] sm:$0xf]
    %v2429 = vld [vmem:[#allocation9 + $0x94] sm:$0xf]
    %v2430 = vld [vmem:[#allocation9 + $0x98] sm:$0xf]
    %v2431 = vld [vmem:[#allocation9 + $0x9c] sm:$0xf]
    %v2432 = vld [vmem:[#allocation9 + $0xa0] sm:$0xf]
    %v2433 = vld [vmem:[#allocation9 + $0xa4] sm:$0xf]
    %v2434 = vld [vmem:[#allocation9 + $0xa8] sm:$0xf]
    %v2435 = vld [vmem:[#allocation9 + $0xac] sm:$0xf]
    %v2436 = vld [vmem:[#allocation9 + $0xb0] sm:$0xf]
    %v2437 = vld [vmem:[#allocation9 + $0xb4] sm:$0xf]
    %v2438 = vld [vmem:[#allocation9 + $0xb8] sm:$0xf]
    %v2439 = vld [vmem:[#allocation9 + $0xbc] sm:$0xf]
    %v2440 = vld [vmem:[#allocation9 + $0xc0] sm:$0xf]
    %v2441 = vld [vmem:[#allocation9 + $0xc4] sm:$0xf]
    %v2442 = vld [vmem:[#allocation9 + $0xc8] sm:$0xf]
    %v2443 = vld [vmem:[#allocation9 + $0xcc] sm:$0xf]
    %v2444 = vld [vmem:[#allocation9 + $0xd0] sm:$0xf]
    %v2445 = vld [vmem:[#allocation9 + $0xd4] sm:$0xf]
    %v2446 = vld [vmem:[#allocation9 + $0xd8] sm:$0xf]
    %v2447 = vld [vmem:[#allocation9 + $0xdc] sm:$0xf]
    %v2448 = vld [vmem:[#allocation9 + $0xe0] sm:$0xf]
    %v2449 = vld [vmem:[#allocation9 + $0xe4] sm:$0xf]
    %v2450 = vld [vmem:[#allocation9 + $0xe8] sm:$0xf]
    %v2451 = vld [vmem:[#allocation9 + $0xec] sm:$0xf]
    %v2452 = vld [vmem:[#allocation9 + $0xf0] sm:$0xf]
    %v2453 = vld [vmem:[#allocation9 + $0xf4] sm:$0xf]
    %v2454 = vld [vmem:[#allocation9 + $0xf8] sm:$0xf]
    %v2455 = vld [vmem:[#allocation9 + $0xfc] sm:$0xf]
    %v2456 = vld [vmem:[#allocation9 + $0x100] sm:$0xf]
    %v2457 = vld [vmem:[#allocation9 + $0x104] sm:$0xf]
    %v2458 = vld [vmem:[#allocation9 + $0x108] sm:$0xf]
    %v2459 = vld [vmem:[#allocation9 + $0x10c] sm:$0xf]
    %v2460 = vld [vmem:[#allocation9 + $0x110] sm:$0xf]
    %v2461 = vld [vmem:[#allocation9 + $0x114] sm:$0xf]
    %v2462 = vld [vmem:[#allocation9 + $0x118] sm:$0xf]
    %v2463 = vld [vmem:[#allocation9 + $0x11c] sm:$0xf]
    %v2464 = vld [vmem:[#allocation9 + $0x120] sm:$0xf]
    %v2465 = vld [vmem:[#allocation9 + $0x124] sm:$0xf]
    %v2466 = vld [vmem:[#allocation9 + $0x128] sm:$0xf]
    %v2467 = vld [vmem:[#allocation9 + $0x12c] sm:$0xf]
    %v2468 = vld [vmem:[#allocation9 + $0x130] sm:$0xf]
    %v2469 = vld [vmem:[#allocation9 + $0x134] sm:$0xf]
    %v2470 = vld [vmem:[#allocation9 + $0x138] sm:$0xf]
    %v2471 = vld [vmem:[#allocation9 + $0x13c] sm:$0xf]
    %v2472 = vlaneseq
    %v2473 = vshrl.u32 %v2472, 7
    %v2474 = vsub.s32 2, %v2473
    %v2475 = vrot.slane %v292, %v2474
    %v2556 = vunpack.c.l.b16 %v2392
    %v2557 = vunpack.c.l.b16 %v2393
    %v2558 = vunpack.c.l.b16 %v2394
    %v2559 = vunpack.c.l.b16 %v2395
    %v2560 = vunpack.c.l.b16 %v2396
    %v2561 = vunpack.c.l.b16 %v2397
    %v2562 = vunpack.c.l.b16 %v2398
    %v2563 = vunpack.c.l.b16 %v2399
    %v2564 = vunpack.c.l.b16 %v2400
    %v2565 = vunpack.c.l.b16 %v2401
    %v2566 = vunpack.c.l.b16 %v2402
    %v2567 = vunpack.c.l.b16 %v2403
    %v2568 = vunpack.c.l.b16 %v2404
    %v2569 = vunpack.c.l.b16 %v2405
    %v2570 = vunpack.c.l.b16 %v2406
    %v2571 = vunpack.c.l.b16 %v2407
    %v2572 = vunpack.c.l.b16 %v2408
    %v2573 = vunpack.c.l.b16 %v2409
    %v2574 = vunpack.c.l.b16 %v2410
    %v2575 = vunpack.c.l.b16 %v2411
    %v2576 = vunpack.c.l.b16 %v2412
    %v2577 = vunpack.c.l.b16 %v2413
    %v2578 = vunpack.c.l.b16 %v2414
    %v2579 = vunpack.c.l.b16 %v2415
    %v2580 = vunpack.c.l.b16 %v2416
    %v2581 = vunpack.c.l.b16 %v2417
    %v2582 = vunpack.c.l.b16 %v2418
    %v2583 = vunpack.c.l.b16 %v2419
    %v2584 = vunpack.c.l.b16 %v2420
    %v2585 = vunpack.c.l.b16 %v2421
    %v2586 = vunpack.c.l.b16 %v2422
    %v2587 = vunpack.c.l.b16 %v2423
    %v2588 = vunpack.c.l.b16 %v2424
    %v2589 = vunpack.c.l.b16 %v2425
    %v2590 = vunpack.c.l.b16 %v2426
    %v2591 = vunpack.c.l.b16 %v2427
    %v2592 = vunpack.c.l.b16 %v2428
    %v2593 = vunpack.c.l.b16 %v2429
    %v2594 = vunpack.c.l.b16 %v2430
    %v2595 = vunpack.c.l.b16 %v2431
    %v2596 = vunpack.c.l.b16 %v2432
    %v2597 = vunpack.c.l.b16 %v2433
    %v2598 = vunpack.c.l.b16 %v2434
    %v2599 = vunpack.c.l.b16 %v2435
    %v2600 = vunpack.c.l.b16 %v2436
    %v2601 = vunpack.c.l.b16 %v2437
    %v2602 = vunpack.c.l.b16 %v2438
    %v2603 = vunpack.c.l.b16 %v2439
    %v2604 = vunpack.c.l.b16 %v2440
    %v2605 = vunpack.c.l.b16 %v2441
    %v2606 = vunpack.c.l.b16 %v2442
    %v2607 = vunpack.c.l.b16 %v2443
    %v2608 = vunpack.c.l.b16 %v2444
    %v2609 = vunpack.c.l.b16 %v2445
    %v2610 = vunpack.c.l.b16 %v2446
    %v2611 = vunpack.c.l.b16 %v2447
    %v2612 = vunpack.c.l.b16 %v2448
    %v2613 = vunpack.c.l.b16 %v2449
    %v2614 = vunpack.c.l.b16 %v2450
    %v2615 = vunpack.c.l.b16 %v2451
    %v2616 = vunpack.c.l.b16 %v2452
    %v2617 = vunpack.c.l.b16 %v2453
    %v2618 = vunpack.c.l.b16 %v2454
    %v2619 = vunpack.c.l.b16 %v2455
    %v2620 = vunpack.c.l.b16 %v2456
    %v2621 = vunpack.c.l.b16 %v2457
    %v2622 = vunpack.c.l.b16 %v2458
    %v2623 = vunpack.c.l.b16 %v2459
    %v2624 = vunpack.c.l.b16 %v2460
    %v2625 = vunpack.c.l.b16 %v2461
    %v2626 = vunpack.c.l.b16 %v2462
    %v2627 = vunpack.c.l.b16 %v2463
    %v2628 = vunpack.c.l.b16 %v2464
    %v2629 = vunpack.c.l.b16 %v2465
    %v2630 = vunpack.c.l.b16 %v2466
    %v2631 = vunpack.c.l.b16 %v2467
    %v2632 = vunpack.c.l.b16 %v2468
    %v2633 = vunpack.c.l.b16 %v2469
    %v2634 = vunpack.c.l.b16 %v2470
    %v2635 = vunpack.c.l.b16 %v2471
    %v2636 = vpack.c.b16 %v2557, %v2556
    %v2637 = vpack.c.b16 %v2559, %v2558
    %v2638 = vpack.c.b16 %v2561, %v2560
    %v2639 = vpack.c.b16 %v2563, %v2562
    %v2640 = vpack.c.b16 %v2565, %v2564
    %v2641 = vpack.c.b16 %v2567, %v2566
    %v2642 = vpack.c.b16 %v2569, %v2568
    %v2643 = vpack.c.b16 %v2571, %v2570
    %v2644 = vpack.c.b16 %v2573, %v2572
    %v2645 = vpack.c.b16 %v2575, %v2574
    %v2646 = vpack.c.b16 %v2577, %v2576
    %v2647 = vpack.c.b16 %v2579, %v2578
    %v2648 = vpack.c.b16 %v2581, %v2580
    %v2649 = vpack.c.b16 %v2583, %v2582
    %v2650 = vpack.c.b16 %v2585, %v2584
    %v2651 = vpack.c.b16 %v2587, %v2586
    %v2652 = vpack.c.b16 %v2589, %v2588
    %v2653 = vpack.c.b16 %v2591, %v2590
    %v2654 = vpack.c.b16 %v2593, %v2592
    %v2655 = vpack.c.b16 %v2595, %v2594
    %v2656 = vpack.c.b16 %v2597, %v2596
    %v2657 = vpack.c.b16 %v2599, %v2598
    %v2658 = vpack.c.b16 %v2601, %v2600
    %v2659 = vpack.c.b16 %v2603, %v2602
    %v2660 = vpack.c.b16 %v2605, %v2604
    %v2661 = vpack.c.b16 %v2607, %v2606
    %v2662 = vpack.c.b16 %v2609, %v2608
    %v2663 = vpack.c.b16 %v2611, %v2610
    %v2664 = vpack.c.b16 %v2613, %v2612
    %v2665 = vpack.c.b16 %v2615, %v2614
    %v2666 = vpack.c.b16 %v2617, %v2616
    %v2667 = vpack.c.b16 %v2619, %v2618
    %v2668 = vpack.c.b16 %v2621, %v2620
    %v2669 = vpack.c.b16 %v2623, %v2622
    %v2670 = vpack.c.b16 %v2625, %v2624
    %v2671 = vpack.c.b16 %v2627, %v2626
    %v2672 = vpack.c.b16 %v2629, %v2628
    %v2673 = vpack.c.b16 %v2631, %v2630
    %v2674 = vpack.c.b16 %v2633, %v2632
    %v2675 = vpack.c.b16 %v2635, %v2634
    %2716 = vmatprep.subr.bf16.mxu0 0
    %2717 = vmatpush1.bf16.msra.mxu0 %v2636
    %2718 = vmatprep.subr.bf16.mxu0 0
    %2719 = vmatpush1.bf16.msra.mxu0 %v2637
    %2720 = vmatprep.subr.bf16.mxu0 0
    %2721 = vmatpush1.bf16.msra.mxu0 %v2638
    %2722 = vmatprep.subr.bf16.mxu0 0
    %2723 = vmatpush1.bf16.msra.mxu0 %v2639
    %2724 = vmatprep.subr.bf16.mxu0 0
    %2725 = vmatpush1.bf16.msra.mxu0 %v2640
    %2726 = vmatprep.subr.bf16.mxu0 0
    %2727 = vmatpush1.bf16.msra.mxu0 %v2641
    %2728 = vmatprep.subr.bf16.mxu0 0
    %2729 = vmatpush1.bf16.msra.mxu0 %v2642
    %2730 = vmatprep.subr.bf16.mxu0 0
    %2731 = vmatpush1.bf16.msra.mxu0 %v2643
    %2732 = vmatprep.subr.bf16.mxu0 0
    %2733 = vmatpush1.bf16.msra.mxu0 %v2644
    %2734 = vmatprep.subr.bf16.mxu0 0
    %2735 = vmatpush1.bf16.msra.mxu0 %v2645
    %2736 = vmatprep.subr.bf16.mxu0 0
    %2737 = vmatpush1.bf16.msra.mxu0 %v2646
    %2738 = vmatprep.subr.bf16.mxu0 0
    %2739 = vmatpush1.bf16.msra.mxu0 %v2647
    %2740 = vmatprep.subr.bf16.mxu0 0
    %2741 = vmatpush1.bf16.msra.mxu0 %v2648
    %2742 = vmatprep.subr.bf16.mxu0 0
    %2743 = vmatpush1.bf16.msra.mxu0 %v2649
    %2744 = vmatprep.subr.bf16.mxu0 0
    %2745 = vmatpush1.bf16.msra.mxu0 %v2650
    %2746 = vmatprep.subr.bf16.mxu0 0
    %2747 = vmatpush1.bf16.msra.mxu0 %v2651
    %2748 = vmatprep.mubr.bf16.mxu0 %v2354
    %2749 = vmatmul.mubr.bf16.gmra.mrb[0].mxu0 %v2342
    %v2750 = vpop.f32.mrb[0].mxu0
    %v2751 = vadd.f32 %v2475, %v2750
    %v2752 = vpop.f32.mrb[0].mxu0
    %v2753 = vpop.f32.mrb[0].mxu0
    %v2754 = vadd.f32 %v2475, %v2753
    %v2755 = vpop.f32.mrb[0].mxu0
    %2756 = vmatprep.mubr.bf16.mxu0 %v2356
    %2757 = vmatmul.mubr.bf16.gmra.mrb[0].mxu0 %v2343
    %v2758 = vpop.f32.mrb[0].mxu0
    %v2759 = vadd.f32 %v2475, %v2758
    %v2760 = vpop.f32.mrb[0].mxu0
    %v2761 = vpop.f32.mrb[0].mxu0
    %v2762 = vadd.f32 %v2475, %v2761
    %v2763 = vpop.f32.mrb[0].mxu0
    %2764 = vmatprep.mubr.bf16.mxu0 %v2358
    %2765 = vmatmul.mubr.bf16.gmra.mrb[0].mxu0 %v2344
    %v2766 = vpop.f32.mrb[0].mxu0
    %v2767 = vadd.f32 %v2475, %v2766
    %v2768 = vpop.f32.mrb[0].mxu0
    %v2769 = vpop.f32.mrb[0].mxu0
    %v2770 = vadd.f32 %v2475, %v2769
    %v2771 = vpop.f32.mrb[0].mxu0
    %2772 = vmatprep.mubr.bf16.mxu0 %v2360
    %2773 = vmatmul.mubr.bf16.gmra.mrb[0].mxu0 %v2345
    %v2774 = vpop.f32.mrb[0].mxu0
    %v2775 = vadd.f32 %v2475, %v2774
    %v2776 = vpop.f32.mrb[0].mxu0
    %v2777 = vpop.f32.mrb[0].mxu0
    %v2778 = vadd.f32 %v2475, %v2777
    %v2779 = vpop.f32.mrb[0].mxu0
    %2780 = vdwg.mxu0
    %2781 = vmatprep.subr.bf16.mxu0 0
    %2782 = vmatpush1.bf16.msra.mxu0 %v2652
    %2783 = vmatprep.subr.bf16.mxu0 0
    %2784 = vmatpush1.bf16.msra.mxu0 %v2653
    %2785 = vmatprep.subr.bf16.mxu0 0
    %2786 = vmatpush1.bf16.msra.mxu0 %v2654
    %2787 = vmatprep.subr.bf16.mxu0 0
    %2788 = vmatpush1.bf16.msra.mxu0 %v2655
    %2789 = vmatprep.subr.bf16.mxu0 0
    %2790 = vmatpush1.bf16.msra.mxu0 %v2656
    %2791 = vmatprep.subr.bf16.mxu0 0
    %2792 = vmatpush1.bf16.msra.mxu0 %v2657
    %2793 = vmatprep.subr.bf16.mxu0 0
    %2794 = vmatpush1.bf16.msra.mxu0 %v2658
    %2795 = vmatprep.subr.bf16.mxu0 0
    %2796 = vmatpush1.bf16.msra.mxu0 %v2659
    %2797 = vmatprep.subr.bf16.mxu0 0
    %2798 = vmatpush1.bf16.msra.mxu0 %v2660
    %2799 = vmatprep.subr.bf16.mxu0 0
    %2800 = vmatpush1.bf16.msra.mxu0 %v2661
    %2801 = vmatprep.subr.bf16.mxu0 0
    %2802 = vmatpush1.bf16.msra.mxu0 %v2662
    %2803 = vmatprep.subr.bf16.mxu0 0
    %2804 = vmatpush1.bf16.msra.mxu0 %v2663
    %2805 = vmatprep.subr.bf16.mxu0 0
    %2806 = vmatpush1.bf16.msra.mxu0 %v2664
    %2807 = vmatprep.subr.bf16.mxu0 0
    %2808 = vmatpush1.bf16.msra.mxu0 %v2665
    %2809 = vmatprep.subr.bf16.mxu0 0
    %2810 = vmatpush1.bf16.msra.mxu0 %v2666
    %2811 = vmatprep.subr.bf16.mxu0 0
    %2812 = vmatpush1.bf16.msra.mxu0 %v2667
    %2813 = vmatprep.mubr.bf16.mxu0 %v2381
    %2814 = vmatmul.mubr.bf16.gmra.mrb[0].mxu0 %v2367
    %v2815 = vpop.f32.mrb[0].mxu0
    %v2816 = vadd.f32 %v2751, %v2815
    %v2817 = vpop.f32.mrb[0].mxu0
    %v2818 = vpop.f32.mrb[0].mxu0
    %v2819 = vadd.f32 %v2754, %v2818
    %v2820 = vpop.f32.mrb[0].mxu0
    %2821 = vmatprep.mubr.bf16.mxu0 %v2383
    %2822 = vmatmul.mubr.bf16.gmra.mrb[0].mxu0 %v2369
    %v2823 = vpop.f32.mrb[0].mxu0
    %v2824 = vadd.f32 %v2759, %v2823
    %v2825 = vpop.f32.mrb[0].mxu0
    %v2826 = vpop.f32.mrb[0].mxu0
    %v2827 = vadd.f32 %v2762, %v2826
    %v2828 = vpop.f32.mrb[0].mxu0
    %2829 = vmatprep.mubr.bf16.mxu0 %v2385
    %2830 = vmatmul.mubr.bf16.gmra.mrb[0].mxu0 %v2371
    %v2831 = vpop.f32.mrb[0].mxu0
    %v2832 = vadd.f32 %v2767, %v2831
    %v2833 = vpop.f32.mrb[0].mxu0
    %v2834 = vpop.f32.mrb[0].mxu0
    %v2835 = vadd.f32 %v2770, %v2834
    %v2836 = vpop.f32.mrb[0].mxu0
    %2837 = vmatprep.mubr.bf16.mxu0 %v2387
    %2838 = vmatmul.mubr.bf16.gmra.mrb[0].mxu0 %v2373
    %v2839 = vpop.f32.mrb[0].mxu0
    %v2840 = vadd.f32 %v2775, %v2839
    %v2841 = vpop.f32.mrb[0].mxu0
    %v2842 = vpop.f32.mrb[0].mxu0
    %v2843 = vadd.f32 %v2778, %v2842
    %v2844 = vpop.f32.mrb[0].mxu0
    %2845 = vdwg.mxu0
    %2846 = vmatprep.subr.bf16.mxu0 0
    %2847 = vmatpush1.bf16.msra.mxu0 %v2668
    %2848 = vmatprep.subr.bf16.mxu0 0
    %2849 = vmatpush1.bf16.msra.mxu0 %v2669
    %2850 = vmatprep.subr.bf16.mxu0 0
    %2851 = vmatpush1.bf16.msra.mxu0 %v2670
    %2852 = vmatprep.subr.bf16.mxu0 0
    %2853 = vmatpush1.bf16.msra.mxu0 %v2671
    %2854 = vmatprep.subr.bf16.mxu0 0
    %2855 = vmatpush1.bf16.msra.mxu0 %v2672
    %2856 = vmatprep.subr.bf16.mxu0 0
    %2857 = vmatpush1.bf16.msra.mxu0 %v2673
    %2858 = vmatprep.subr.bf16.mxu0 0
    %2859 = vmatpush1.bf16.msra.mxu0 %v2674
    %2860 = vmatprep.subr.bf16.mxu0 0
    %2861 = vmatpush1.bf16.msra.mxu0 %v2675
    %2862 = vmatprep.subr.bf16.mxu0 0
    %2863 = vmatpush1.bf16.msra.mxu0 0
    %2864 = vmatprep.subr.bf16.mxu0 0
    %2865 = vmatpush1.bf16.msra.mxu0 0
    %2866 = vmatprep.subr.bf16.mxu0 0
    %2867 = vmatpush1.bf16.msra.mxu0 0
    %2868 = vmatprep.subr.bf16.mxu0 0
    %2869 = vmatpush1.bf16.msra.mxu0 0
    %2870 = vmatprep.subr.bf16.mxu0 0
    %2871 = vmatpush1.bf16.msra.mxu0 0
    %2872 = vmatprep.subr.bf16.mxu0 0
    %2873 = vmatpush1.bf16.msra.mxu0 0
    %2874 = vmatprep.subr.bf16.mxu0 0
    %2875 = vmatpush1.bf16.msra.mxu0 0
    %2876 = vmatprep.subr.bf16.mxu0 0
    %2877 = vmatpush1.bf16.msra.mxu0 0
    %2878 = vmatprep.mubr.bf16.mxu0 0
    %2879 = vmatmul.mubr.bf16.gmra.mrb[0].mxu0 %v2343
    %v2880 = vpop.f32.mrb[0].mxu0
    %v2881 = vadd.f32 %v2816, %v2880
    %v2882 = vpop.f32.mrb[0].mxu0
    %v2883 = vpop.f32.mrb[0].mxu0
    %v2884 = vadd.f32 %v2819, %v2883
    %v2885 = vpop.f32.mrb[0].mxu0
    %2886 = vmatprep.mubr.bf16.mxu0 0
    %2887 = vmatmul.mubr.bf16.gmra.mrb[0].mxu0 %v2344
    %v2888 = vpop.f32.mrb[0].mxu0
    %v2889 = vadd.f32 %v2824, %v2888
    %v2890 = vpop.f32.mrb[0].mxu0
    %v2891 = vpop.f32.mrb[0].mxu0
    %v2892 = vadd.f32 %v2827, %v2891
    %v2893 = vpop.f32.mrb[0].mxu0
    %2894 = vmatprep.mubr.bf16.mxu0 0
    %2895 = vmatmul.mubr.bf16.gmra.mrb[0].mxu0 %v2345
    %v2896 = vpop.f32.mrb[0].mxu0
    %v2897 = vadd.f32 %v2832, %v2896
    %v2898 = vpop.f32.mrb[0].mxu0
    %v2899 = vpop.f32.mrb[0].mxu0
    %v2900 = vadd.f32 %v2835, %v2899
    %v2901 = vpop.f32.mrb[0].mxu0
    %2902 = vmatprep.mubr.bf16.mxu0 0
    %2903 = vmatmul.mubr.bf16.gmra.mrb[0].mxu0 %v2346
    %v2904 = vpop.f32.mrb[0].mxu0
    %v2905 = vadd.f32 %v2840, %v2904
    %v2906 = vpop.f32.mrb[0].mxu0
    %v2907 = vpop.f32.mrb[0].mxu0
    %v2908 = vadd.f32 %v2843, %v2907
    %v2909 = vpop.f32.mrb[0].mxu0
    %2910 = vdwg.mxu0
    %v2911 = vmax.f32 %v2881, 0.0
    %v2912 = vmax.f32 %v2884, 0.0
    %v2913 = vmax.f32 %v2889, 0.0
    %v2914 = vmax.f32 %v2892, 0.0
    %v2915 = vmax.f32 %v2897, 0.0
    %v2916 = vmax.f32 %v2900, 0.0
    %v2917 = vmax.f32 %v2905, 0.0
    %v2918 = vmax.f32 %v2908, 0.0
    %v2919 = vpack.c.bf16 %v2912, %v2911
    %v2920 = vpack.c.bf16 %v2914, %v2913
    %v2921 = vpack.c.bf16 %v2916, %v2915
    %v2922 = vpack.c.bf16 %v2918, %v2917
    %v2923 = vld [vmem:[%s3] sm:$0xf]
    %v2924 = vld [vmem:[%s3 + $0x4] sm:$0xf]
    %v2925 = vld [vmem:[%s3 + $0x8] sm:$0xf]
    %v2926 = vld [vmem:[%s3 + $0xc] sm:$0xf]
    %v2927 = vld [vmem:[%s3 + $0x10] sm:$0xf]
    %v2928 = vld [vmem:[%s3 + $0x14] sm:$0xf]
    %v2929 = vld [vmem:[%s3 + $0x18] sm:$0xf]
    %v2930 = vld [vmem:[%s3 + $0x1c] sm:$0xf]
    %v2931 = vld [vmem:[%s3 + $0x20] sm:$0xf]
    %v2932 = vld [vmem:[%s3 + $0x24] sm:$0xf]
    %v2933 = vld [vmem:[%s3 + $0x28] sm:$0xf]
    %v2934 = vld [vmem:[%s3 + $0x2c] sm:$0xf]
    %v2935 = vld [vmem:[%s3 + $0x30] sm:$0xf]
    %v2936 = vld [vmem:[%s3 + $0x34] sm:$0xf]
    %v2937 = vld [vmem:[%s3 + $0x38] sm:$0xf]
    %v2938 = vld [vmem:[%s3 + $0x3c] sm:$0xf]
    %v2939 = vlaneseq
    %v2940 = vshrl.u32 %v2939, 7
    %v2941 = vsub.s32 3, %v2940
    %v2942 = vrot.slane %v292, %v2941
    %v2959 = vunpack.c.l.b16 %v2923
    %v2960 = vunpack.c.l.b16 %v2924
    %v2961 = vunpack.c.l.b16 %v2925
    %v2962 = vunpack.c.l.b16 %v2926
    %v2963 = vunpack.c.l.b16 %v2927
    %v2964 = vunpack.c.l.b16 %v2928
    %v2965 = vunpack.c.l.b16 %v2929
    %v2966 = vunpack.c.l.b16 %v2930
    %v2967 = vunpack.c.l.b16 %v2931
    %v2968 = vunpack.c.l.b16 %v2932
    %v2969 = vunpack.c.l.b16 %v2933
    %v2970 = vunpack.c.l.b16 %v2934
    %v2971 = vunpack.c.l.b16 %v2935
    %v2972 = vunpack.c.l.b16 %v2936
    %v2973 = vunpack.c.l.b16 %v2937
    %v2974 = vunpack.c.l.b16 %v2938
    %v2975 = vpack.c.b16 %v2960, %v2959
    %v2976 = vpack.c.b16 %v2962, %v2961
    %v2977 = vpack.c.b16 %v2964, %v2963
    %v2978 = vpack.c.b16 %v2966, %v2965
    %v2979 = vpack.c.b16 %v2968, %v2967
    %v2980 = vpack.c.b16 %v2970, %v2969
    %v2981 = vpack.c.b16 %v2972, %v2971
    %v2982 = vpack.c.b16 %v2974, %v2973
    %2991 = vmatprep.subr.bf16.mxu0 0
    %2992 = vmatpush1.bf16.msra.mxu0 %v2975
    %2993 = vmatprep.subr.bf16.mxu0 0
    %2994 = vmatpush1.bf16.msra.mxu0 %v2976
    %2995 = vmatprep.subr.bf16.mxu0 0
    %2996 = vmatpush1.bf16.msra.mxu0 %v2977
    %2997 = vmatprep.subr.bf16.mxu0 0
    %2998 = vmatpush1.bf16.msra.mxu0 %v2978
    %2999 = vmatprep.subr.bf16.mxu0 0
    %3000 = vmatpush1.bf16.msra.mxu0 %v2979
    %3001 = vmatprep.subr.bf16.mxu0 0
    %3002 = vmatpush1.bf16.msra.mxu0 %v2980
    %3003 = vmatprep.subr.bf16.mxu0 0
    %3004 = vmatpush1.bf16.msra.mxu0 %v2981
    %3005 = vmatprep.subr.bf16.mxu0 0
    %3006 = vmatpush1.bf16.msra.mxu0 %v2982
    %3007 = vmatprep.subr.bf16.mxu0 0
    %3008 = vmatpush1.bf16.msra.mxu0 0
    %3009 = vmatprep.subr.bf16.mxu0 0
    %3010 = vmatpush1.bf16.msra.mxu0 0
    %3011 = vmatprep.subr.bf16.mxu0 0
    %3012 = vmatpush1.bf16.msra.mxu0 0
    %3013 = vmatprep.subr.bf16.mxu0 0
    %3014 = vmatpush1.bf16.msra.mxu0 0
    %3015 = vmatprep.subr.bf16.mxu0 0
    %3016 = vmatpush1.bf16.msra.mxu0 0
    %3017 = vmatprep.subr.bf16.mxu0 0
    %3018 = vmatpush1.bf16.msra.mxu0 0
    %3019 = vmatprep.subr.bf16.mxu0 0
    %3020 = vmatpush1.bf16.msra.mxu0 0
    %3021 = vmatprep.subr.bf16.mxu0 0
    %3022 = vmatpush1.bf16.msra.mxu0 0
    %3023 = vmatprep.mubr.bf16.mxu0 0
    %3024 = vmatmul.mubr.bf16.gmra.mrb[0].mxu0 %v2919
    %v3025 = vpop.f32.mrb[0].mxu0
    %v3026 = vadd.f32 %v2942, %v3025
    %v3027 = vpop.f32.mrb[0].mxu0
    %v3028 = vpop.f32.mrb[0].mxu0
    %v3029 = vadd.f32 %v2942, %v3028
    %v3030 = vpop.f32.mrb[0].mxu0
    %3031 = vmatprep.mubr.bf16.mxu0 0
    %3032 = vmatmul.mubr.bf16.gmra.mrb[0].mxu0 %v2920
    %v3033 = vpop.f32.mrb[0].mxu0
    %v3034 = vadd.f32 %v2942, %v3033
    %v3035 = vpop.f32.mrb[0].mxu0
    %v3036 = vpop.f32.mrb[0].mxu0
    %v3037 = vadd.f32 %v2942, %v3036
    %v3038 = vpop.f32.mrb[0].mxu0
    %3039 = vmatprep.mubr.bf16.mxu0 0
    %3040 = vmatmul.mubr.bf16.gmra.mrb[0].mxu0 %v2921
    %v3041 = vpop.f32.mrb[0].mxu0
    %v3042 = vadd.f32 %v2942, %v3041
    %v3043 = vpop.f32.mrb[0].mxu0
    %v3044 = vpop.f32.mrb[0].mxu0
    %v3045 = vadd.f32 %v2942, %v3044
    %v3046 = vpop.f32.mrb[0].mxu0
    %3047 = vmatprep.mubr.bf16.mxu0 0
    %3048 = vmatmul.mubr.bf16.gmra.mrb[0].mxu0 %v2922
    %v3049 = vpop.f32.mrb[0].mxu0
    %v3050 = vadd.f32 %v2942, %v3049
    %v3051 = vpop.f32.mrb[0].mxu0
    %v3052 = vpop.f32.mrb[0].mxu0
    %v3053 = vadd.f32 %v2942, %v3052
    %v3054 = vpop.f32.mrb[0].mxu0
    %3055 = vdwg.mxu0
    %v3056 = vmax.f32 %v3026, 0.0
    %v3057 = vmax.f32 %v3029, 0.0
    %v3058 = vmax.f32 %v3034, 0.0
    %v3059 = vmax.f32 %v3037, 0.0
    %v3060 = vmax.f32 %v3042, 0.0
    %v3061 = vmax.f32 %v3045, 0.0
    %v3062 = vmax.f32 %v3050, 0.0
    %v3063 = vmax.f32 %v3053, 0.0
    %v3064 = vpack.c.bf16 %v3057, %v3056
    %v3065 = vpack.c.bf16 %v3059, %v3058
    %v3066 = vpack.c.bf16 %v3061, %v3060
    %v3067 = vpack.c.bf16 %v3063, %v3062
    %v3068 = vld [vmem:[#allocation11] sm:$0xf]
    %v3069 = vld [vmem:[#allocation11 + $0x4] sm:$0xf]
    %v3070 = vld [vmem:[#allocation11 + $0x8] sm:$0xf]
    %v3071 = vld [vmem:[#allocation11 + $0xc] sm:$0xf]
    %v3072 = vld [vmem:[#allocation11 + $0x10] sm:$0xf]
    %v3073 = vld [vmem:[#allocation11 + $0x14] sm:$0xf]
    %v3074 = vld [vmem:[#allocation11 + $0x18] sm:$0xf]
    %v3075 = vld [vmem:[#allocation11 + $0x1c] sm:$0xf]
    %v3076 = vld [vmem:[#allocation11 + $0x20] sm:$0xf]
    %v3077 = vld [vmem:[#allocation11 + $0x24] sm:$0xf]
    %v3078 = vld [vmem:[#allocation11 + $0x28] sm:$0xf]
    %v3079 = vld [vmem:[#allocation11 + $0x2c] sm:$0xf]
    %v3080 = vld [vmem:[#allocation11 + $0x30] sm:$0xf]
    %v3081 = vld [vmem:[#allocation11 + $0x34] sm:$0xf]
    %v3082 = vld [vmem:[#allocation11 + $0x38] sm:$0xf]
    %v3083 = vld [vmem:[#allocation11 + $0x3c] sm:$0xf]
    %v3084 = vlaneseq
    %v3085 = vshrl.u32 %v3084, 7
    %v3086 = vsub.s32 4, %v3085
    %v3087 = vrot.slane %v292, %v3086
    %v3104 = vunpack.c.l.b16 %v3068
    %v3105 = vunpack.c.l.b16 %v3069
    %v3106 = vunpack.c.l.b16 %v3070
    %v3107 = vunpack.c.l.b16 %v3071
    %v3108 = vunpack.c.l.b16 %v3072
    %v3109 = vunpack.c.l.b16 %v3073
    %v3110 = vunpack.c.l.b16 %v3074
    %v3111 = vunpack.c.l.b16 %v3075
    %v3112 = vunpack.c.l.b16 %v3076
    %v3113 = vunpack.c.l.b16 %v3077
    %v3114 = vunpack.c.l.b16 %v3078
    %v3115 = vunpack.c.l.b16 %v3079
    %v3116 = vunpack.c.l.b16 %v3080
    %v3117 = vunpack.c.l.b16 %v3081
    %v3118 = vunpack.c.l.b16 %v3082
    %v3119 = vunpack.c.l.b16 %v3083
    %v3120 = vpack.c.b16 %v3105, %v3104
    %v3121 = vpack.c.b16 %v3107, %v3106
    %v3122 = vpack.c.b16 %v3109, %v3108
    %v3123 = vpack.c.b16 %v3111, %v3110
    %v3124 = vpack.c.b16 %v3113, %v3112
    %v3125 = vpack.c.b16 %v3115, %v3114
    %v3126 = vpack.c.b16 %v3117, %v3116
    %v3127 = vpack.c.b16 %v3119, %v3118
    %3136 = vmatprep.subr.bf16.mxu0 0
    %3137 = vmatpush1.bf16.msra.mxu0 %v3120
    %3138 = vmatprep.subr.bf16.mxu0 0
    %3139 = vmatpush1.bf16.msra.mxu0 %v3121
    %3140 = vmatprep.subr.bf16.mxu0 0
    %3141 = vmatpush1.bf16.msra.mxu0 %v3122
    %3142 = vmatprep.subr.bf16.mxu0 0
    %3143 = vmatpush1.bf16.msra.mxu0 %v3123
    %3144 = vmatprep.subr.bf16.mxu0 0
    %3145 = vmatpush1.bf16.msra.mxu0 %v3124
    %3146 = vmatprep.subr.bf16.mxu0 0
    %3147 = vmatpush1.bf16.msra.mxu0 %v3125
    %3148 = vmatprep.subr.bf16.mxu0 0
    %3149 = vmatpush1.bf16.msra.mxu0 %v3126
    %3150 = vmatprep.subr.bf16.mxu0 0
    %3151 = vmatpush1.bf16.msra.mxu0 %v3127
    %3152 = vmatprep.subr.bf16.mxu0 0
    %3153 = vmatpush1.bf16.msra.mxu0 0
    %3154 = vmatprep.subr.bf16.mxu0 0
    %3155 = vmatpush1.bf16.msra.mxu0 0
    %3156 = vmatprep.subr.bf16.mxu0 0
    %3157 = vmatpush1.bf16.msra.mxu0 0
    %3158 = vmatprep.subr.bf16.mxu0 0
    %3159 = vmatpush1.bf16.msra.mxu0 0
    %3160 = vmatprep.subr.bf16.mxu0 0
    %3161 = vmatpush1.bf16.msra.mxu0 0
    %3162 = vmatprep.subr.bf16.mxu0 0
    %3163 = vmatpush1.bf16.msra.mxu0 0
    %3164 = vmatprep.subr.bf16.mxu0 0
    %3165 = vmatpush1.bf16.msra.mxu0 0
    %3166 = vmatprep.subr.bf16.mxu0 0
    %3167 = vmatpush1.bf16.msra.mxu0 0
    %3168 = vmatprep.mubr.bf16.mxu0 0
    %3169 = vmatmul.mubr.bf16.gmra.mrb[0].mxu0 %v3064
    %v3170 = vpop.f32.mrb[0].mxu0
    %v3171 = vadd.f32 %v3087, %v3170
    %v3172 = vpop.f32.mrb[0].mxu0
    %v3173 = vpop.f32.mrb[0].mxu0
    %v3174 = vadd.f32 %v3087, %v3173
    %v3175 = vpop.f32.mrb[0].mxu0
    %3176 = vmatprep.mubr.bf16.mxu0 0
    %3177 = vmatmul.mubr.bf16.gmra.mrb[0].mxu0 %v3065
    %v3178 = vpop.f32.mrb[0].mxu0
    %v3179 = vadd.f32 %v3087, %v3178
    %v3180 = vpop.f32.mrb[0].mxu0
    %v3181 = vpop.f32.mrb[0].mxu0
    %v3182 = vadd.f32 %v3087, %v3181
    %v3183 = vpop.f32.mrb[0].mxu0
    %3184 = vmatprep.mubr.bf16.mxu0 0
    %3185 = vmatmul.mubr.bf16.gmra.mrb[0].mxu0 %v3066
    %v3186 = vpop.f32.mrb[0].mxu0
    %v3187 = vadd.f32 %v3087, %v3186
    %v3188 = vpop.f32.mrb[0].mxu0
    %v3189 = vpop.f32.mrb[0].mxu0
    %v3190 = vadd.f32 %v3087, %v3189
    %v3191 = vpop.f32.mrb[0].mxu0
    %3192 = vmatprep.mubr.bf16.mxu0 0
    %3193 = vmatmul.mubr.bf16.gmra.mrb[0].mxu0 %v3067
    %v3194 = vpop.f32.mrb[0].mxu0
    %v3195 = vadd.f32 %v3087, %v3194
    %v3196 = vpop.f32.mrb[0].mxu0
    %v3197 = vpop.f32.mrb[0].mxu0
    %v3198 = vadd.f32 %v3087, %v3197
    %v3199 = vpop.f32.mrb[0].mxu0
    %3200 = vdwg.mxu0
    %3201 = vst [vmem:[%s8] sm:$0xff] %v3171
    %3202 = vst [vmem:[%s8 + $0x8] sm:$0xff] %v3174
    %3203 = vst [vmem:[%s8 + $0x10] sm:$0xff] %v3179
    %3204 = vst [vmem:[%s8 + $0x18] sm:$0xff] %v3182
    %3205 = vst [vmem:[%s8 + $0x20] sm:$0xff] %v3187
    %3206 = vst [vmem:[%s8 + $0x28] sm:$0xff] %v3190
    %3207 = vst [vmem:[%s8 + $0x30] sm:$0xff] %v3195
    %3208 = vst [vmem:[%s8 + $0x38] sm:$0xff] %v3198
    // Predicated region
    $region46: #{lenet_forward.2} parent=1 // pred_check
      _
    $region47: #{lenet_forward.2} parent=1 // pred_check_branch
      %3210 = sbr.rel (0) target = $region49
    $region48: #{lenet_forward.2} parent=1 // pred_region
      _
    $region49: #{lenet_forward.2} parent=1 // pred_fallthru
      _
    // Predicated region
    $region50: #{lenet_forward.2} parent=1 // pred_check
      _
    $region51: #{lenet_forward.2} parent=1 // pred_check_branch
      %3212 = sbr.rel (0) target = $region53
    $region52: #{lenet_forward.2} parent=1 // pred_region
      _
    $region53: #{lenet_forward.2} parent=1 // pred_fallthru
      _
    %3213 = vsyncpa [#allocation8], 1
    %3214 = vsyncpa [#allocation10], 1
    %3215 = vsyncpa [#allocation13], 1

</llo_original>
